<compile_context>
chip_gen: v6e
topology: v6e:2x2x1
jax: 0.10.0
libtpu: 0.0.40
codegen_flags: <defaults>
</compile_context>

<pallas_src>
import jax
import jax.numpy as jnp
from jax import lax
from jax.experimental import pallas as pl
from jax.experimental.pallas import tpu as pltpu

# ----------------------------- model config --------------------------------
HIDDEN = 32           # config.hidden_size
GNN_OUT = 16          # args.gnn_layer1_out_dim
HEADS = 4             # GATConv(heads=4)
NUM_CLASSES = 2       # args.num_classes
EDGE_PERCENT = 0.3    # args.edge_percent  -> CE class weights [0.3, 0.7]
WINDOW = 2            # args.window_size (used to build edge_index)
LEAKY_SLOPE = 0.2     # PyG GATConv default negative_slope
BN_EPS = 1e-5

NUM_GRAPHS = 2
NODES_PER_GRAPH = 8
NUM_NODES = NUM_GRAPHS * NODES_PER_GRAPH

# packed parameter-slab row offsets (every row is GNN_OUT lanes wide)
_D = GNN_OUT
ROW_W1A = 0                        # rows [0, D)      linear1 weight, src half
ROW_W1B = _D                       # rows [D, 2D)     linear1 weight, dst half
ROW_GAT_BIAS = 2 * _D              # 1 row            GATConv bias
ROW_BN_SCALE = 2 * _D + 1          # 1 row            folded BN scale
ROW_BN_SHIFT = 2 * _D + 2          # 1 row            folded BN shift
ROW_B1 = 2 * _D + 3                # 1 row            linear1 bias
ROW_W2T = 2 * _D + 4               # NUM_CLASSES rows linear2 weight (transposed)
ROW_B2 = ROW_W2T + NUM_CLASSES     # 1 row            linear2 bias (first C lanes)
SLAB_ROWS = ROW_B2 + 1


# --------------------------- exact (erf) GELU -------------------------------
def _erf(x):
    # Abramowitz & Stegun 7.1.26, |err| < 1.5e-7 (f32-exact), built only from
    # exp / mul / add / div so it lowers cleanly in Mosaic.
    a1, a2, a3, a4, a5 = (0.254829592, -0.284496736, 1.421413741,
                          -1.453152027, 1.061405429)
    p = 0.3275911
    sgn = jnp.where(x >= 0.0, 1.0, -1.0)
    ax = jnp.abs(x)
    t = 1.0 / (1.0 + p * ax)
    poly = ((((a5 * t + a4) * t + a3) * t + a2) * t + a1) * t
    return sgn * (1.0 - poly * jnp.exp(-ax * ax))


def _gelu_exact(x):
    # matches torch.nn.functional.gelu (default, erf form)
    return 0.5 * x * (1.0 + _erf(x * 0.7071067811865476))


# ------------------------------- fused kernel --------------------------------
def fused_gat_edge_kernel(x_ref, adj_ref, gat_w_ref, u_att_ref, slab_ref,
                          sel_ref, woh_ref, probs_ref, loss_ref,
                          alpha_sc, val_sc):
    """GATConv(heads, concat=False) -> GELU -> BN(eval) -> edge MLP -> CE."""
    n = x_ref.shape[0]
    d = GNN_OUT
    x = x_ref[...]                                    # (N, HIDDEN)
    adj = adj_ref[...]                                # (N, N): adj[i,j]=1 <=> edge j->i

    # ---- GAT attention coefficients for ALL heads, no transposes ----------
    #   a_src_rows[h, j] = att_src[h] . (x[j] @ W[h])   (source term, row form)
    #   a_dst_cols[i, h] = att_dst[h] . (x[i] @ W[h])   (target term, col form)
    # u_att = (2, HEADS, HIDDEN) with u[h] = W[h] @ att[h] (folded in wrapper).
    dn_t = (((1,), (1,)), ((), ()))                   # contract last dims (trans_b)
    a_src_rows = lax.dot_general(u_att_ref[0], x, dn_t,
                                 preferred_element_type=jnp.float32)   # (HEADS, N)
    a_dst_cols = lax.dot_general(x, u_att_ref[1], dn_t,
                                 preferred_element_type=jnp.float32)   # (N, HEADS)

    neg_big = jnp.float32(-1e30)
    for h in range(HEADS):                            # unrolled, HEADS = 4
        xw_h = jnp.dot(x, gat_w_ref[h],
                       preferred_element_type=jnp.float32)             # (N, D)
        logits = a_dst_cols[:, h:h + 1] + a_src_rows[h:h + 1, :]        # (N, N)
        logits = jnp.where(logits > 0, logits, LEAKY_SLOPE * logits)    # leaky_relu
        # structural mask; every row has >= 1 valid entry because GATConv
        # add_self_loops=True, so the -1e30 entries always vanish after softmax.
        logits = jnp.where(adj > 0, logits, neg_big)
        logits = logits - jnp.max(logits, axis=-1, keepdims=True)
        p = jnp.exp(logits)
        inv = pl.reciprocal(jnp.sum(p, axis=-1, keepdims=True), approx=True)
        # stage alpha / values so aggregation + head-sum is ONE MXU matmul
        alpha_sc[:, h * n:(h + 1) * n] = p * inv                        # (N, N) block
        val_sc[h * n:(h + 1) * n, :] = xw_h                             # (N, D) block

    # sum_h alpha_h @ xw_h  ==  (N, HEADS*N) @ (HEADS*N, D)
    acc = jnp.dot(alpha_sc[...], val_sc[...],
                  preferred_element_type=jnp.float32)                   # (N, D)
    gat_out = (acc * jnp.float32(1.0 / HEADS)                           # head mean
               + slab_ref[ROW_GAT_BIAS:ROW_GAT_BIAS + 1, :])            # + bias

    # ---- exact GELU -> BatchNorm1d (eval, folded to scale/shift) ----------
    act = _gelu_exact(gat_out)
    xg = (act * slab_ref[ROW_BN_SCALE:ROW_BN_SCALE + 1, :]
          + slab_ref[ROW_BN_SHIFT:ROW_BN_SHIFT + 1, :])
    # F.dropout: eval mode -> no-op

    # ---- edge head: gather via one-hot selection matmuls (MXU) ------------
    x_src = jnp.dot(sel_ref[0], xg, preferred_element_type=jnp.float32)  # (E, D)
    x_dst = jnp.dot(sel_ref[1], xg, preferred_element_type=jnp.float32)  # (E, D)

    # linear1(cat(x_src, x_dst)) as two matmuls against the split weight
    h1 = (jnp.dot(x_src, slab_ref[ROW_W1A:ROW_W1A + d, :],
                  preferred_element_type=jnp.float32)
          + jnp.dot(x_dst, slab_ref[ROW_W1B:ROW_W1B + d, :],
                    preferred_element_type=jnp.float32)
          + slab_ref[ROW_B1:ROW_B1 + 1, :])
    h1 = _gelu_exact(h1)

    # linear2 (weight stored transposed in the slab -> trans_b dot)
    w2t = slab_ref[ROW_W2T:ROW_W2T + NUM_CLASSES, :]                    # (C, D)
    logits2 = lax.dot_general(h1, w2t, dn_t,
                              preferred_element_type=jnp.float32)       # (E, C)
    logits2 = logits2 + slab_ref[ROW_B2:ROW_B2 + 1, :][:, :NUM_CLASSES]

    # softmax(dim=-1) + CrossEntropyLoss(weight=class_w)
    m = jnp.max(logits2, axis=-1, keepdims=True)
    z = logits2 - m
    ez = jnp.exp(z)
    denom = jnp.sum(ez, axis=-1, keepdims=True)
    probs_ref[...] = ez * pl.reciprocal(denom, approx=True)

    logp = z - jnp.log(denom)                         # log_softmax
    woh = woh_ref[...]                                # (E, C) = onehot(y) * w[y]
    num = jnp.sum(woh * (-logp), keepdims=True)       # (1, 1)
    den = jnp.sum(woh, keepdims=True)                 # (1, 1)
    loss_ref[...] = num / den


# ------------------------------ wrapper --------------------------------------
def _vmem():
    return pl.BlockSpec(memory_space=pltpu.MemorySpace.VMEM)


def gat_uni_layer_bi_proj_forward(params, cls_tokens, adj, src_idx, dst_idx,
                                  ylabels, class_w):
    # TODO(synk): the BERT encoder (AutoModel) has no clean Pallas equivalent
    # here; its pooled [CLS] output `cls_tokens` is supplied as a precomputed input.
    hp = lax.Precision.HIGHEST
    n = cls_tokens.shape[0]
    d = GNN_OUT
    e = src_idx.shape[0]
    c = class_w.shape[-1]

    # ---- one-time parameter folding (tiny, plain JAX) ----------------------
    # BatchNorm1d eval -> affine scale/shift
    bn_scale = params["bn_gamma"] * lax.rsqrt(params["bn_var"] + BN_EPS)
    bn_shift = params["bn_beta"] - params["bn_mean"] * bn_scale
    # attention vectors folded into input space: u[h] = W[h] @ att[h]
    u_src = jnp.einsum("hkd,hd->hk", params["gat_w"], params["att_src"],
                       precision=hp)
    u_dst = jnp.einsum("hkd,hd->hk", params["gat_w"], params["att_dst"],
                       precision=hp)
    u_att = jnp.stack([u_src, u_dst], axis=0)               # (2, HEADS, HIDDEN)

    # one packed (SLAB_ROWS, D) slab for every small width-D parameter
    b2_pad = jnp.zeros((1, d), jnp.float32).at[:, :c].set(params["b2"])
    slab = jnp.concatenate([
        params["w1"],            # rows [0, 2D)
        params["gat_bias"],      # ROW_GAT_BIAS
        bn_scale, bn_shift,      # ROW_BN_SCALE / ROW_BN_SHIFT
        params["b1"],            # ROW_B1
        params["w2"].T,          # ROW_W2T (C rows)
        b2_pad,                  # ROW_B2
    ], axis=0)

    # edge gather as one-hot selection matrices (gather runs on the MXU)
    sel = jnp.stack([jax.nn.one_hot(src_idx, n, dtype=jnp.float32),
                     jax.nn.one_hot(dst_idx, n, dtype=jnp.float32)], axis=0)

    # per-edge class weight folded into the one-hot target
    woh = jax.nn.one_hot(ylabels, c, dtype=jnp.float32) * class_w        # (E, C)

    probs, loss = pl.pallas_call(
        fused_gat_edge_kernel,
        out_shape=(jax.ShapeDtypeStruct((e, c), jnp.float32),
                   jax.ShapeDtypeStruct((1, 1), jnp.float32)),
        in_specs=[_vmem() for _ in range(7)],
        out_specs=(_vmem(), _vmem()),
        scratch_shapes=[pltpu.VMEM((n, HEADS * n), jnp.float32),   # stacked alphas
                        pltpu.VMEM((HEADS * n, d), jnp.float32)],  # stacked values
    )(cls_tokens, adj, params["gat_w"], u_att, slab, sel, woh)
    return loss[0, 0], probs, ylabels


# --------------------------- parameter init ---------------------------------
def _glorot(key, shape, fan_in, fan_out):
    lim = (6.0 / (fan_in + fan_out)) ** 0.5
    return jax.random.uniform(key, shape, jnp.float32, -lim, lim)


def init_params(key):
    ks = jax.random.split(key, 8)
    d, c = GNN_OUT, NUM_CLASSES
    b1_lim = 1.0 / (2 * d) ** 0.5
    b2_lim = 1.0 / d ** 0.5
    return {
        # GATConv(HIDDEN, d, heads=4, concat=False): per-head weight (H, HIDDEN, d)
        "gat_w":   _glorot(ks[0], (HEADS, HIDDEN, d), HIDDEN, HEADS * d),
        "att_src": _glorot(ks[1], (HEADS, d), d, d),
        "att_dst": _glorot(ks[2], (HEADS, d), d, d),
        "gat_bias": jnp.zeros((1, d), jnp.float32),
        # BatchNorm1d(d) at init (eval mode running stats)
        "bn_gamma": jnp.ones((1, d), jnp.float32),
        "bn_beta":  jnp.zeros((1, d), jnp.float32),
        "bn_mean":  jnp.zeros((1, d), jnp.float32),
        "bn_var":   jnp.ones((1, d), jnp.float32),
        # linear1: (2d -> d), xavier_uniform, stored as (in, out)
        "w1": _glorot(ks[3], (2 * d, d), 2 * d, d),
        "b1": jax.random.uniform(ks[4], (1, d), jnp.float32, -b1_lim, b1_lim),
        # linear2: (d -> num_classes), xavier_uniform
        "w2": _glorot(ks[5], (d, c), d, c),
        "b2": jax.random.uniform(ks[6], (1, c), jnp.float32, -b2_lim, b2_lim),
    }


# --------------------------- pure-JAX reference ------------------------------
def _reference(params, cls_tokens, adj, src_idx, dst_idx, ylabels, class_w):
    hp = lax.Precision.HIGHEST
    d = GNN_OUT
    n = cls_tokens.shape[0]
    acc = jnp.zeros((n, d), jnp.float32)
    for h in range(HEADS):
        xw_h = jnp.dot(cls_tokens, params["gat_w"][h], precision=hp)
        a_d = jnp.sum(xw_h * params["att_dst"][h], axis=-1, keepdims=True)
        a_s = jnp.sum(xw_h * params["att_src"][h], axis=-1, keepdims=True)
        logit = a_d + a_s.T
        logit = jnp.where(logit > 0, logit, LEAKY_SLOPE * logit)
        logit = jnp.where(adj > 0, logit, -1e30)
        alpha = jax.nn.softmax(logit, axis=-1)
        acc = acc + jnp.dot(alpha, xw_h, precision=hp)
    gat = acc / HEADS + params["gat_bias"]
    act = _gelu_exact(gat)
    x = ((act - params["bn_mean"]) * lax.rsqrt(params["bn_var"] + BN_EPS)
         * params["bn_gamma"] + params["bn_beta"])
    edge = jnp.concatenate([x[src_idx], x[dst_idx]], axis=-1)
    h1 = _gelu_exact(jnp.dot(edge, params["w1"], precision=hp) + params["b1"])
    logits = jnp.dot(h1, params["w2"], precision=hp) + params["b2"]
    probs = jax.nn.softmax(logits, axis=-1)
    logp = jax.nn.log_softmax(logits, axis=-1)
    onehot = jax.nn.one_hot(ylabels, NUM_CLASSES, dtype=jnp.float32)
    per_w = jnp.sum(onehot * class_w, axis=-1)
    per_nll = -jnp.sum(onehot * logp, axis=-1)
    loss = jnp.sum(per_w * per_nll) / jnp.sum(per_w)
    return loss, probs


# --------------------------------- main --------------------------------------
if __name__ == "__main__":
    key = jax.random.PRNGKey(0)
    k_param, k_tok = jax.random.split(key)
    params = init_params(k_param)

    # synthetic batch: 2 graphs x 8 nodes; [CLS] embeddings stand in for BERT output
    cls_tokens = jax.random.normal(k_tok, (NUM_NODES, HIDDEN), jnp.float32)

    # dense adjacency (target, source) from window-based edge_index + self-loops
    adj = [[0.0] * NUM_NODES for _ in range(NUM_NODES)]
    for g in range(NUM_GRAPHS):
        off = g * NODES_PER_GRAPH
        for i in range(NODES_PER_GRAPH):
            adj[off + i][off + i] = 1.0                  # GATConv add_self_loops=True
            for w in range(1, WINDOW + 1):
                if i + w < NODES_PER_GRAPH:
                    adj[off + i][off + i + w] = 1.0
                    adj[off + i + w][off + i] = 1.0
    adj = jnp.asarray(adj, jnp.float32)

    # "all_edges" candidate pairs per graph (local ids) + labels
    local_pairs = [(0, 1), (1, 3), (2, 5), (3, 4), (4, 7), (6, 7)]
    local_labels = [1, 0, 1, 0, 1, 0]
    src_idx, dst_idx, labels = [], [], []
    for g in range(NUM_GRAPHS):
        off = g * NODES_PER_GRAPH
        for (a, b), y in zip(local_pairs, local_labels):
            src_idx.append(a + off)
            dst_idx.append(b + off)
            labels.append(y)
    src_idx = jnp.asarray(src_idx, jnp.int32)
    dst_idx = jnp.asarray(dst_idx, jnp.int32)
    ylabels = jnp.asarray(labels, jnp.int32)
    class_w = jnp.asarray([[EDGE_PERCENT, 1.0 - EDGE_PERCENT]], jnp.float32)

    fwd = jax.jit(gat_uni_layer_bi_proj_forward)
    loss, probs, ylab = fwd(params, cls_tokens, adj, src_idx, dst_idx,
                            ylabels, class_w)
    jax.block_until_ready((loss, probs, ylab))

    ref_loss, ref_probs = _reference(params, cls_tokens, adj, src_idx, dst_idx,
                                     ylabels, class_w)
    assert probs.shape == (len(labels), NUM_CLASSES)
    assert jnp.allclose(probs, ref_probs, atol=2e-3, rtol=2e-3), "probs mismatch"
    assert jnp.allclose(loss, ref_loss, atol=2e-3, rtol=2e-3), "loss mismatch"
    print("KERNEL_OK")
</pallas_src>

<mosaic_0001>
module attributes {stable_mosaic.version = 11 : i64} {
  func.func @fused_gat_edge_kernel(%arg0: memref<16x32xf32, #tpu.memory_space<vmem>>, %arg1: memref<16x16xf32, #tpu.memory_space<vmem>>, %arg2: memref<4x32x16xf32, #tpu.memory_space<vmem>>, %arg3: memref<2x4x32xf32, #tpu.memory_space<vmem>>, %arg4: memref<39x16xf32, #tpu.memory_space<vmem>>, %arg5: memref<2x12x16xf32, #tpu.memory_space<vmem>>, %arg6: memref<12x2xf32, #tpu.memory_space<vmem>>, %arg7: memref<12x2xf32, #tpu.memory_space<vmem>>, %arg8: memref<1x1xf32, #tpu.memory_space<vmem>>, %arg9: memref<16x64xf32, #tpu.memory_space<vmem>>, %arg10: memref<64x16xf32, #tpu.memory_space<vmem>>) attributes {dimension_semantics = [], scalar_prefetch = 0 : i64, scratch_operands = 2 : i64, tpu.core_type = #tpu.core_type<tc>} {
    %c0 = arith.constant 0 : index
    %c0_0 = arith.constant 0 : index
    %0 = vector.load %arg0[%c0, %c0_0] : memref<16x32xf32, #tpu.memory_space<vmem>>, vector<16x32xf32>
    %c0_1 = arith.constant 0 : index
    %c0_2 = arith.constant 0 : index
    %1 = vector.load %arg1[%c0_1, %c0_2] : memref<16x16xf32, #tpu.memory_space<vmem>>, vector<16x16xf32>
    %c0_3 = arith.constant 0 : index
    %c0_4 = arith.constant 0 : index
    %c0_5 = arith.constant 0 : index
    %2 = vector.load %arg3[%c0_3, %c0_4, %c0_5] : memref<2x4x32xf32, #tpu.memory_space<vmem>>, vector<1x4x32xf32>
    %3 = vector.shape_cast %2 : vector<1x4x32xf32> to vector<4x32xf32>
    %cst = arith.constant dense<0.000000e+00> : vector<4x16xf32>
    %4 = tpu.matmul %3, %0, %cst {dimension_numbers = #tpu.dot_dimension_numbers<[1], [1], [0], [0], [0, 0, 1, 0], [], []>} : vector<4x32xf32>, vector<16x32xf32>, vector<4x16xf32> -> vector<4x16xf32>
    %c1 = arith.constant 1 : index
    %c0_6 = arith.constant 0 : index
    %c0_7 = arith.constant 0 : index
    %5 = vector.load %arg3[%c1, %c0_6, %c0_7] : memref<2x4x32xf32, #tpu.memory_space<vmem>>, vector<1x4x32xf32>
    %6 = vector.shape_cast %5 : vector<1x4x32xf32> to vector<4x32xf32>
    %cst_8 = arith.constant dense<0.000000e+00> : vector<16x4xf32>
    %7 = tpu.matmul %0, %6, %cst_8 {dimension_numbers = #tpu.dot_dimension_numbers<[1], [1], [0], [0], [0, 0, 1, 0], [], []>} : vector<16x32xf32>, vector<4x32xf32>, vector<16x4xf32> -> vector<16x4xf32>
    %c0_9 = arith.constant 0 : index
    %c0_10 = arith.constant 0 : index
    %c0_11 = arith.constant 0 : index
    %8 = vector.load %arg2[%c0_9, %c0_10, %c0_11] : memref<4x32x16xf32, #tpu.memory_space<vmem>>, vector<1x32x16xf32>
    %9 = vector.shape_cast %8 : vector<1x32x16xf32> to vector<32x16xf32>
    %cst_12 = arith.constant dense<0.000000e+00> : vector<16x16xf32>
    %10 = tpu.matmul %0, %9, %cst_12 {dimension_numbers = #tpu.dot_dimension_numbers<[1], [0], [0], [1], [0, 0, 1, 1], [], []>} : vector<16x32xf32>, vector<32x16xf32>, vector<16x16xf32> -> vector<16x16xf32>
    %11 = vector.extract_strided_slice %7 {offsets = [0, 0], sizes = [16, 1], strides = [1, 1]} : vector<16x4xf32> to vector<16x1xf32>
    %12 = vector.extract_strided_slice %4 {offsets = [0, 0], sizes = [1, 16], strides = [1, 1]} : vector<4x16xf32> to vector<1x16xf32>
    %13 = vector.broadcast %11 : vector<16x1xf32> to vector<16x16xf32>
    %14 = vector.broadcast %12 : vector<1x16xf32> to vector<16x16xf32>
    %15 = arith.addf %13, %14 : vector<16x16xf32>
    %cst_13 = arith.constant 0.000000e+00 : f32
    %16 = vector.broadcast %cst_13 : f32 to vector<16x16xf32>
    %17 = arith.cmpf ogt, %15, %16 : vector<16x16xf32>
    %cst_14 = arith.constant 2.000000e-01 : f32
    %18 = vector.broadcast %cst_14 : f32 to vector<16x16xf32>
    %19 = arith.mulf %18, %15 : vector<16x16xf32>
    %20 = arith.select %17, %15, %19 : vector<16x16xi1>, vector<16x16xf32>
    %cst_15 = arith.constant 0.000000e+00 : f32
    %21 = vector.broadcast %cst_15 : f32 to vector<16x16xf32>
    %22 = arith.cmpf ogt, %1, %21 : vector<16x16xf32>
    %cst_16 = arith.constant -1.000000e+30 : f32
    %23 = vector.broadcast %cst_16 : f32 to vector<16x16xf32>
    %24 = arith.select %22, %20, %23 : vector<16x16xi1>, vector<16x16xf32>
    %cst_17 = arith.constant dense<0xFF800000> : vector<16xf32>
    %25 = vector.multi_reduction <maximumf>, %24, %cst_17 [1] : vector<16x16xf32> to vector<16xf32>
    %26 = vector.shape_cast %25 : vector<16xf32> to vector<16x1xf32>
    %27 = vector.broadcast %26 : vector<16x1xf32> to vector<16x16xf32>
    %28 = arith.subf %24, %27 : vector<16x16xf32>
    %29 = math.exp %28 : vector<16x16xf32>
    %cst_18 = arith.constant dense<0.000000e+00> : vector<16xf32>
    %30 = vector.multi_reduction <add>, %29, %cst_18 [1] : vector<16x16xf32> to vector<16xf32>
    %31 = vector.shape_cast %30 : vector<16xf32> to vector<16x1xf32>
    %32 = tpu.reciprocal %31 {approx = true} : vector<16x1xf32> -> vector<16x1xf32>
    %33 = vector.broadcast %32 : vector<16x1xf32> to vector<16x16xf32>
    %34 = arith.mulf %29, %33 : vector<16x16xf32>
    %c0_19 = arith.constant 0 : index
    %c0_20 = arith.constant 0 : index
    %35 = vector.load %arg9[%c0_19, %c0_20] : memref<16x64xf32, #tpu.memory_space<vmem>>, vector<16x16xf32>
    tpu.vector_store %arg9[%c0_19, %c0_20], %34 {strides = array<i32>} : memref<16x64xf32, #tpu.memory_space<vmem>>, vector<16x16xf32>,
    %c0_21 = arith.constant 0 : index
    %c0_22 = arith.constant 0 : index
    %36 = vector.load %arg10[%c0_21, %c0_22] : memref<64x16xf32, #tpu.memory_space<vmem>>, vector<16x16xf32>
    tpu.vector_store %arg10[%c0_21, %c0_22], %10 {strides = array<i32>} : memref<64x16xf32, #tpu.memory_space<vmem>>, vector<16x16xf32>,
    %c1_23 = arith.constant 1 : index
    %c0_24 = arith.constant 0 : index
    %c0_25 = arith.constant 0 : index
    %37 = vector.load %arg2[%c1_23, %c0_24, %c0_25] : memref<4x32x16xf32, #tpu.memory_space<vmem>>, vector<1x32x16xf32>
    %38 = vector.shape_cast %37 : vector<1x32x16xf32> to vector<32x16xf32>
    %cst_26 = arith.constant dense<0.000000e+00> : vector<16x16xf32>
    %39 = tpu.matmul %0, %38, %cst_26 {dimension_numbers = #tpu.dot_dimension_numbers<[1], [0], [0], [1], [0, 0, 1, 1], [], []>} : vector<16x32xf32>, vector<32x16xf32>, vector<16x16xf32> -> vector<16x16xf32>
    %40 = vector.extract_strided_slice %7 {offsets = [0, 1], sizes = [16, 1], strides = [1, 1]} : vector<16x4xf32> to vector<16x1xf32>
    %41 = vector.extract_strided_slice %4 {offsets = [1, 0], sizes = [1, 16], strides = [1, 1]} : vector<4x16xf32> to vector<1x16xf32>
    %42 = vector.broadcast %40 : vector<16x1xf32> to vector<16x16xf32>
    %43 = vector.broadcast %41 : vector<1x16xf32> to vector<16x16xf32>
    %44 = arith.addf %42, %43 : vector<16x16xf32>
    %cst_27 = arith.constant 0.000000e+00 : f32
    %45 = vector.broadcast %cst_27 : f32 to vector<16x16xf32>
    %46 = arith.cmpf ogt, %44, %45 : vector<16x16xf32>
    %cst_28 = arith.constant 2.000000e-01 : f32
    %47 = vector.broadcast %cst_28 : f32 to vector<16x16xf32>
    %48 = arith.mulf %47, %44 : vector<16x16xf32>
    %49 = arith.select %46, %44, %48 : vector<16x16xi1>, vector<16x16xf32>
    %cst_29 = arith.constant 0.000000e+00 : f32
    %50 = vector.broadcast %cst_29 : f32 to vector<16x16xf32>
    %51 = arith.cmpf ogt, %1, %50 : vector<16x16xf32>
    %cst_30 = arith.constant -1.000000e+30 : f32
    %52 = vector.broadcast %cst_30 : f32 to vector<16x16xf32>
    %53 = arith.select %51, %49, %52 : vector<16x16xi1>, vector<16x16xf32>
    %cst_31 = arith.constant dense<0xFF800000> : vector<16xf32>
    %54 = vector.multi_reduction <maximumf>, %53, %cst_31 [1] : vector<16x16xf32> to vector<16xf32>
    %55 = vector.shape_cast %54 : vector<16xf32> to vector<16x1xf32>
    %56 = vector.broadcast %55 : vector<16x1xf32> to vector<16x16xf32>
    %57 = arith.subf %53, %56 : vector<16x16xf32>
    %58 = math.exp %57 : vector<16x16xf32>
    %cst_32 = arith.constant dense<0.000000e+00> : vector<16xf32>
    %59 = vector.multi_reduction <add>, %58, %cst_32 [1] : vector<16x16xf32> to vector<16xf32>
    %60 = vector.shape_cast %59 : vector<16xf32> to vector<16x1xf32>
    %61 = tpu.reciprocal %60 {approx = true} : vector<16x1xf32> -> vector<16x1xf32>
    %62 = vector.broadcast %61 : vector<16x1xf32> to vector<16x16xf32>
    %63 = arith.mulf %58, %62 : vector<16x16xf32>
    %c0_33 = arith.constant 0 : index
    %c16 = arith.constant 16 : index
    %64 = vector.load %arg9[%c0_33, %c16] : memref<16x64xf32, #tpu.memory_space<vmem>>, vector<16x16xf32>
    tpu.vector_store %arg9[%c0_33, %c16], %63 {strides = array<i32>} : memref<16x64xf32, #tpu.memory_space<vmem>>, vector<16x16xf32>,
    %c16_34 = arith.constant 16 : index
    %c0_35 = arith.constant 0 : index
    %65 = vector.load %arg10[%c16_34, %c0_35] : memref<64x16xf32, #tpu.memory_space<vmem>>, vector<16x16xf32>
    tpu.vector_store %arg10[%c16_34, %c0_35], %39 {strides = array<i32>} : memref<64x16xf32, #tpu.memory_space<vmem>>, vector<16x16xf32>,
    %c2 = arith.constant 2 : index
    %c0_36 = arith.constant 0 : index
    %c0_37 = arith.constant 0 : index
    %66 = vector.load %arg2[%c2, %c0_36, %c0_37] : memref<4x32x16xf32, #tpu.memory_space<vmem>>, vector<1x32x16xf32>
    %67 = vector.shape_cast %66 : vector<1x32x16xf32> to vector<32x16xf32>
    %cst_38 = arith.constant dense<0.000000e+00> : vector<16x16xf32>
    %68 = tpu.matmul %0, %67, %cst_38 {dimension_numbers = #tpu.dot_dimension_numbers<[1], [0], [0], [1], [0, 0, 1, 1], [], []>} : vector<16x32xf32>, vector<32x16xf32>, vector<16x16xf32> -> vector<16x16xf32>
    %69 = vector.extract_strided_slice %7 {offsets = [0, 2], sizes = [16, 1], strides = [1, 1]} : vector<16x4xf32> to vector<16x1xf32>
    %70 = vector.extract_strided_slice %4 {offsets = [2, 0], sizes = [1, 16], strides = [1, 1]} : vector<4x16xf32> to vector<1x16xf32>
    %71 = vector.broadcast %69 : vector<16x1xf32> to vector<16x16xf32>
    %72 = vector.broadcast %70 : vector<1x16xf32> to vector<16x16xf32>
    %73 = arith.addf %71, %72 : vector<16x16xf32>
    %cst_39 = arith.constant 0.000000e+00 : f32
    %74 = vector.broadcast %cst_39 : f32 to vector<16x16xf32>
    %75 = arith.cmpf ogt, %73, %74 : vector<16x16xf32>
    %cst_40 = arith.constant 2.000000e-01 : f32
    %76 = vector.broadcast %cst_40 : f32 to vector<16x16xf32>
    %77 = arith.mulf %76, %73 : vector<16x16xf32>
    %78 = arith.select %75, %73, %77 : vector<16x16xi1>, vector<16x16xf32>
    %cst_41 = arith.constant 0.000000e+00 : f32
    %79 = vector.broadcast %cst_41 : f32 to vector<16x16xf32>
    %80 = arith.cmpf ogt, %1, %79 : vector<16x16xf32>
    %cst_42 = arith.constant -1.000000e+30 : f32
    %81 = vector.broadcast %cst_42 : f32 to vector<16x16xf32>
    %82 = arith.select %80, %78, %81 : vector<16x16xi1>, vector<16x16xf32>
    %cst_43 = arith.constant dense<0xFF800000> : vector<16xf32>
    %83 = vector.multi_reduction <maximumf>, %82, %cst_43 [1] : vector<16x16xf32> to vector<16xf32>
    %84 = vector.shape_cast %83 : vector<16xf32> to vector<16x1xf32>
    %85 = vector.broadcast %84 : vector<16x1xf32> to vector<16x16xf32>
    %86 = arith.subf %82, %85 : vector<16x16xf32>
    %87 = math.exp %86 : vector<16x16xf32>
    %cst_44 = arith.constant dense<0.000000e+00> : vector<16xf32>
    %88 = vector.multi_reduction <add>, %87, %cst_44 [1] : vector<16x16xf32> to vector<16xf32>
    %89 = vector.shape_cast %88 : vector<16xf32> to vector<16x1xf32>
    %90 = tpu.reciprocal %89 {approx = true} : vector<16x1xf32> -> vector<16x1xf32>
    %91 = vector.broadcast %90 : vector<16x1xf32> to vector<16x16xf32>
    %92 = arith.mulf %87, %91 : vector<16x16xf32>
    %c0_45 = arith.constant 0 : index
    %c32 = arith.constant 32 : index
    %93 = vector.load %arg9[%c0_45, %c32] : memref<16x64xf32, #tpu.memory_space<vmem>>, vector<16x16xf32>
    tpu.vector_store %arg9[%c0_45, %c32], %92 {strides = array<i32>} : memref<16x64xf32, #tpu.memory_space<vmem>>, vector<16x16xf32>,
    %c32_46 = arith.constant 32 : index
    %c0_47 = arith.constant 0 : index
    %94 = vector.load %arg10[%c32_46, %c0_47] : memref<64x16xf32, #tpu.memory_space<vmem>>, vector<16x16xf32>
    tpu.vector_store %arg10[%c32_46, %c0_47], %68 {strides = array<i32>} : memref<64x16xf32, #tpu.memory_space<vmem>>, vector<16x16xf32>,
    %c3 = arith.constant 3 : index
    %c0_48 = arith.constant 0 : index
    %c0_49 = arith.constant 0 : index
    %95 = vector.load %arg2[%c3, %c0_48, %c0_49] : memref<4x32x16xf32, #tpu.memory_space<vmem>>, vector<1x32x16xf32>
    %96 = vector.shape_cast %95 : vector<1x32x16xf32> to vector<32x16xf32>
    %cst_50 = arith.constant dense<0.000000e+00> : vector<16x16xf32>
    %97 = tpu.matmul %0, %96, %cst_50 {dimension_numbers = #tpu.dot_dimension_numbers<[1], [0], [0], [1], [0, 0, 1, 1], [], []>} : vector<16x32xf32>, vector<32x16xf32>, vector<16x16xf32> -> vector<16x16xf32>
    %98 = vector.extract_strided_slice %7 {offsets = [0, 3], sizes = [16, 1], strides = [1, 1]} : vector<16x4xf32> to vector<16x1xf32>
    %99 = vector.extract_strided_slice %4 {offsets = [3, 0], sizes = [1, 16], strides = [1, 1]} : vector<4x16xf32> to vector<1x16xf32>
    %100 = vector.broadcast %98 : vector<16x1xf32> to vector<16x16xf32>
    %101 = vector.broadcast %99 : vector<1x16xf32> to vector<16x16xf32>
    %102 = arith.addf %100, %101 : vector<16x16xf32>
    %cst_51 = arith.constant 0.000000e+00 : f32
    %103 = vector.broadcast %cst_51 : f32 to vector<16x16xf32>
    %104 = arith.cmpf ogt, %102, %103 : vector<16x16xf32>
    %cst_52 = arith.constant 2.000000e-01 : f32
    %105 = vector.broadcast %cst_52 : f32 to vector<16x16xf32>
    %106 = arith.mulf %105, %102 : vector<16x16xf32>
    %107 = arith.select %104, %102, %106 : vector<16x16xi1>, vector<16x16xf32>
    %cst_53 = arith.constant 0.000000e+00 : f32
    %108 = vector.broadcast %cst_53 : f32 to vector<16x16xf32>
    %109 = arith.cmpf ogt, %1, %108 : vector<16x16xf32>
    %cst_54 = arith.constant -1.000000e+30 : f32
    %110 = vector.broadcast %cst_54 : f32 to vector<16x16xf32>
    %111 = arith.select %109, %107, %110 : vector<16x16xi1>, vector<16x16xf32>
    %cst_55 = arith.constant dense<0xFF800000> : vector<16xf32>
    %112 = vector.multi_reduction <maximumf>, %111, %cst_55 [1] : vector<16x16xf32> to vector<16xf32>
    %113 = vector.shape_cast %112 : vector<16xf32> to vector<16x1xf32>
    %114 = vector.broadcast %113 : vector<16x1xf32> to vector<16x16xf32>
    %115 = arith.subf %111, %114 : vector<16x16xf32>
    %116 = math.exp %115 : vector<16x16xf32>
    %cst_56 = arith.constant dense<0.000000e+00> : vector<16xf32>
    %117 = vector.multi_reduction <add>, %116, %cst_56 [1] : vector<16x16xf32> to vector<16xf32>
    %118 = vector.shape_cast %117 : vector<16xf32> to vector<16x1xf32>
    %119 = tpu.reciprocal %118 {approx = true} : vector<16x1xf32> -> vector<16x1xf32>
    %120 = vector.broadcast %119 : vector<16x1xf32> to vector<16x16xf32>
    %121 = arith.mulf %116, %120 : vector<16x16xf32>
    %c0_57 = arith.constant 0 : index
    %c48 = arith.constant 48 : index
    %122 = vector.load %arg9[%c0_57, %c48] : memref<16x64xf32, #tpu.memory_space<vmem>>, vector<16x16xf32>
    tpu.vector_store %arg9[%c0_57, %c48], %121 {strides = array<i32>} : memref<16x64xf32, #tpu.memory_space<vmem>>, vector<16x16xf32>,
    %c48_58 = arith.constant 48 : index
    %c0_59 = arith.constant 0 : index
    %123 = vector.load %arg10[%c48_58, %c0_59] : memref<64x16xf32, #tpu.memory_space<vmem>>, vector<16x16xf32>
    tpu.vector_store %arg10[%c48_58, %c0_59], %97 {strides = array<i32>} : memref<64x16xf32, #tpu.memory_space<vmem>>, vector<16x16xf32>,
    %c0_60 = arith.constant 0 : index
    %c0_61 = arith.constant 0 : index
    %124 = vector.load %arg9[%c0_60, %c0_61] : memref<16x64xf32, #tpu.memory_space<vmem>>, vector<16x64xf32>
    %c0_62 = arith.constant 0 : index
    %c0_63 = arith.constant 0 : index
    %125 = vector.load %arg10[%c0_62, %c0_63] : memref<64x16xf32, #tpu.memory_space<vmem>>, vector<64x16xf32>
    %cst_64 = arith.constant dense<0.000000e+00> : vector<16x16xf32>
    %126 = tpu.matmul %124, %125, %cst_64 {dimension_numbers = #tpu.dot_dimension_numbers<[1], [0], [0], [1], [0, 0, 1, 1], [], []>} : vector<16x64xf32>, vector<64x16xf32>, vector<16x16xf32> -> vector<16x16xf32>
    %cst_65 = arith.constant 2.500000e-01 : f32
    %127 = vector.broadcast %cst_65 : f32 to vector<16x16xf32>
    %128 = arith.mulf %126, %127 : vector<16x16xf32>
    %c32_66 = arith.constant 32 : index
    %c0_67 = arith.constant 0 : index
    %129 = vector.load %arg4[%c32_66, %c0_67] : memref<39x16xf32, #tpu.memory_space<vmem>>, vector<1x16xf32>
    %130 = vector.broadcast %129 : vector<1x16xf32> to vector<16x16xf32>
    %131 = arith.addf %128, %130 : vector<16x16xf32>
    %cst_68 = arith.constant 5.000000e-01 : f32
    %132 = vector.broadcast %cst_68 : f32 to vector<16x16xf32>
    %133 = arith.mulf %132, %131 : vector<16x16xf32>
    %cst_69 = arith.constant 0.707106769 : f32
    %134 = vector.broadcast %cst_69 : f32 to vector<16x16xf32>
    %135 = arith.mulf %131, %134 : vector<16x16xf32>
    %cst_70 = arith.constant 0.000000e+00 : f32
    %136 = vector.broadcast %cst_70 : f32 to vector<16x16xf32>
    %137 = arith.cmpf oge, %135, %136 : vector<16x16xf32>
    %cst_71 = arith.constant 1.000000e+00 : f32
    %cst_72 = arith.constant -1.000000e+00 : f32
    %138 = vector.broadcast %cst_71 : f32 to vector<16x16xf32>
    %139 = vector.broadcast %cst_72 : f32 to vector<16x16xf32>
    %140 = arith.select %137, %138, %139 : vector<16x16xi1>, vector<16x16xf32>
    %141 = math.absf %135 : vector<16x16xf32>
    %cst_73 = arith.constant 0.327591091 : f32
    %142 = vector.broadcast %cst_73 : f32 to vector<16x16xf32>
    %143 = arith.mulf %142, %141 : vector<16x16xf32>
    %cst_74 = arith.constant 1.000000e+00 : f32
    %144 = vector.broadcast %cst_74 : f32 to vector<16x16xf32>
    %145 = arith.addf %144, %143 : vector<16x16xf32>
    %cst_75 = arith.constant 1.000000e+00 : f32
    %146 = vector.broadcast %cst_75 : f32 to vector<16x16xf32>
    %147 = arith.divf %146, %145 : vector<16x16xf32>
    %cst_76 = arith.constant 1.06140542 : f32
    %148 = vector.broadcast %cst_76 : f32 to vector<16x16xf32>
    %149 = arith.mulf %148, %147 : vector<16x16xf32>
    %cst_77 = arith.constant -1.45315206 : f32
    %150 = vector.broadcast %cst_77 : f32 to vector<16x16xf32>
    %151 = arith.addf %149, %150 : vector<16x16xf32>
    %152 = arith.mulf %151, %147 : vector<16x16xf32>
    %cst_78 = arith.constant 1.42141378 : f32
    %153 = vector.broadcast %cst_78 : f32 to vector<16x16xf32>
    %154 = arith.addf %152, %153 : vector<16x16xf32>
    %155 = arith.mulf %154, %147 : vector<16x16xf32>
    %cst_79 = arith.constant -0.284496725 : f32
    %156 = vector.broadcast %cst_79 : f32 to vector<16x16xf32>
    %157 = arith.addf %155, %156 : vector<16x16xf32>
    %158 = arith.mulf %157, %147 : vector<16x16xf32>
    %cst_80 = arith.constant 0.254829586 : f32
    %159 = vector.broadcast %cst_80 : f32 to vector<16x16xf32>
    %160 = arith.addf %158, %159 : vector<16x16xf32>
    %161 = arith.mulf %160, %147 : vector<16x16xf32>
    %cst_81 = arith.constant 0.000000e+00 : f32
    %162 = vector.broadcast %cst_81 : f32 to vector<16x16xf32>
    %163 = arith.subf %162, %141 : vector<16x16xf32>
    %164 = arith.mulf %163, %141 : vector<16x16xf32>
    %165 = math.exp %164 : vector<16x16xf32>
    %166 = arith.mulf %161, %165 : vector<16x16xf32>
    %cst_82 = arith.constant 1.000000e+00 : f32
    %167 = vector.broadcast %cst_82 : f32 to vector<16x16xf32>
    %168 = arith.subf %167, %166 : vector<16x16xf32>
    %169 = arith.mulf %140, %168 : vector<16x16xf32>
    %cst_83 = arith.constant 1.000000e+00 : f32
    %170 = vector.broadcast %cst_83 : f32 to vector<16x16xf32>
    %171 = arith.addf %170, %169 : vector<16x16xf32>
    %172 = arith.mulf %133, %171 : vector<16x16xf32>
    %c33 = arith.constant 33 : index
    %c0_84 = arith.constant 0 : index
    %173 = vector.load %arg4[%c33, %c0_84] : memref<39x16xf32, #tpu.memory_space<vmem>>, vector<1x16xf32>
    %174 = vector.broadcast %173 : vector<1x16xf32> to vector<16x16xf32>
    %175 = arith.mulf %172, %174 : vector<16x16xf32>
    %c34 = arith.constant 34 : index
    %c0_85 = arith.constant 0 : index
    %176 = vector.load %arg4[%c34, %c0_85] : memref<39x16xf32, #tpu.memory_space<vmem>>, vector<1x16xf32>
    %177 = vector.broadcast %176 : vector<1x16xf32> to vector<16x16xf32>
    %178 = arith.addf %175, %177 : vector<16x16xf32>
    %c0_86 = arith.constant 0 : index
    %c0_87 = arith.constant 0 : index
    %c0_88 = arith.constant 0 : index
    %179 = vector.load %arg5[%c0_86, %c0_87, %c0_88] : memref<2x12x16xf32, #tpu.memory_space<vmem>>, vector<1x12x16xf32>
    %180 = vector.shape_cast %179 : vector<1x12x16xf32> to vector<12x16xf32>
    %cst_89 = arith.constant dense<0.000000e+00> : vector<12x16xf32>
    %181 = tpu.matmul %180, %178, %cst_89 {dimension_numbers = #tpu.dot_dimension_numbers<[1], [0], [0], [1], [0, 0, 1, 1], [], []>} : vector<12x16xf32>, vector<16x16xf32>, vector<12x16xf32> -> vector<12x16xf32>
    %c1_90 = arith.constant 1 : index
    %c0_91 = arith.constant 0 : index
    %c0_92 = arith.constant 0 : index
    %182 = vector.load %arg5[%c1_90, %c0_91, %c0_92] : memref<2x12x16xf32, #tpu.memory_space<vmem>>, vector<1x12x16xf32>
    %183 = vector.shape_cast %182 : vector<1x12x16xf32> to vector<12x16xf32>
    %cst_93 = arith.constant dense<0.000000e+00> : vector<12x16xf32>
    %184 = tpu.matmul %183, %178, %cst_93 {dimension_numbers = #tpu.dot_dimension_numbers<[1], [0], [0], [1], [0, 0, 1, 1], [], []>} : vector<12x16xf32>, vector<16x16xf32>, vector<12x16xf32> -> vector<12x16xf32>
    %c0_94 = arith.constant 0 : index
    %c0_95 = arith.constant 0 : index
    %185 = vector.load %arg4[%c0_94, %c0_95] : memref<39x16xf32, #tpu.memory_space<vmem>>, vector<16x16xf32>
    %cst_96 = arith.constant dense<0.000000e+00> : vector<12x16xf32>
    %186 = tpu.matmul %181, %185, %cst_96 {dimension_numbers = #tpu.dot_dimension_numbers<[1], [0], [0], [1], [0, 0, 1, 1], [], []>} : vector<12x16xf32>, vector<16x16xf32>, vector<12x16xf32> -> vector<12x16xf32>
    %c16_97 = arith.constant 16 : index
    %c0_98 = arith.constant 0 : index
    %187 = vector.load %arg4[%c16_97, %c0_98] : memref<39x16xf32, #tpu.memory_space<vmem>>, vector<16x16xf32>
    %cst_99 = arith.constant dense<0.000000e+00> : vector<12x16xf32>
    %188 = tpu.matmul %184, %187, %cst_99 {dimension_numbers = #tpu.dot_dimension_numbers<[1], [0], [0], [1], [0, 0, 1, 1], [], []>} : vector<12x16xf32>, vector<16x16xf32>, vector<12x16xf32> -> vector<12x16xf32>
    %189 = arith.addf %186, %188 : vector<12x16xf32>
    %c35 = arith.constant 35 : index
    %c0_100 = arith.constant 0 : index
    %190 = vector.load %arg4[%c35, %c0_100] : memref<39x16xf32, #tpu.memory_space<vmem>>, vector<1x16xf32>
    %191 = vector.broadcast %190 : vector<1x16xf32> to vector<12x16xf32>
    %192 = arith.addf %189, %191 : vector<12x16xf32>
    %cst_101 = arith.constant 5.000000e-01 : f32
    %193 = vector.broadcast %cst_101 : f32 to vector<12x16xf32>
    %194 = arith.mulf %193, %192 : vector<12x16xf32>
    %cst_102 = arith.constant 0.707106769 : f32
    %195 = vector.broadcast %cst_102 : f32 to vector<12x16xf32>
    %196 = arith.mulf %192, %195 : vector<12x16xf32>
    %cst_103 = arith.constant 0.000000e+00 : f32
    %197 = vector.broadcast %cst_103 : f32 to vector<12x16xf32>
    %198 = arith.cmpf oge, %196, %197 : vector<12x16xf32>
    %cst_104 = arith.constant 1.000000e+00 : f32
    %cst_105 = arith.constant -1.000000e+00 : f32
    %199 = vector.broadcast %cst_104 : f32 to vector<12x16xf32>
    %200 = vector.broadcast %cst_105 : f32 to vector<12x16xf32>
    %201 = arith.select %198, %199, %200 : vector<12x16xi1>, vector<12x16xf32>
    %202 = math.absf %196 : vector<12x16xf32>
    %cst_106 = arith.constant 0.327591091 : f32
    %203 = vector.broadcast %cst_106 : f32 to vector<12x16xf32>
    %204 = arith.mulf %203, %202 : vector<12x16xf32>
    %cst_107 = arith.constant 1.000000e+00 : f32
    %205 = vector.broadcast %cst_107 : f32 to vector<12x16xf32>
    %206 = arith.addf %205, %204 : vector<12x16xf32>
    %cst_108 = arith.constant 1.000000e+00 : f32
    %207 = vector.broadcast %cst_108 : f32 to vector<12x16xf32>
    %208 = arith.divf %207, %206 : vector<12x16xf32>
    %cst_109 = arith.constant 1.06140542 : f32
    %209 = vector.broadcast %cst_109 : f32 to vector<12x16xf32>
    %210 = arith.mulf %209, %208 : vector<12x16xf32>
    %cst_110 = arith.constant -1.45315206 : f32
    %211 = vector.broadcast %cst_110 : f32 to vector<12x16xf32>
    %212 = arith.addf %210, %211 : vector<12x16xf32>
    %213 = arith.mulf %212, %208 : vector<12x16xf32>
    %cst_111 = arith.constant 1.42141378 : f32
    %214 = vector.broadcast %cst_111 : f32 to vector<12x16xf32>
    %215 = arith.addf %213, %214 : vector<12x16xf32>
    %216 = arith.mulf %215, %208 : vector<12x16xf32>
    %cst_112 = arith.constant -0.284496725 : f32
    %217 = vector.broadcast %cst_112 : f32 to vector<12x16xf32>
    %218 = arith.addf %216, %217 : vector<12x16xf32>
    %219 = arith.mulf %218, %208 : vector<12x16xf32>
    %cst_113 = arith.constant 0.254829586 : f32
    %220 = vector.broadcast %cst_113 : f32 to vector<12x16xf32>
    %221 = arith.addf %219, %220 : vector<12x16xf32>
    %222 = arith.mulf %221, %208 : vector<12x16xf32>
    %cst_114 = arith.constant 0.000000e+00 : f32
    %223 = vector.broadcast %cst_114 : f32 to vector<12x16xf32>
    %224 = arith.subf %223, %202 : vector<12x16xf32>
    %225 = arith.mulf %224, %202 : vector<12x16xf32>
    %226 = math.exp %225 : vector<12x16xf32>
    %227 = arith.mulf %222, %226 : vector<12x16xf32>
    %cst_115 = arith.constant 1.000000e+00 : f32
    %228 = vector.broadcast %cst_115 : f32 to vector<12x16xf32>
    %229 = arith.subf %228, %227 : vector<12x16xf32>
    %230 = arith.mulf %201, %229 : vector<12x16xf32>
    %cst_116 = arith.constant 1.000000e+00 : f32
    %231 = vector.broadcast %cst_116 : f32 to vector<12x16xf32>
    %232 = arith.addf %231, %230 : vector<12x16xf32>
    %233 = arith.mulf %194, %232 : vector<12x16xf32>
    %c36 = arith.constant 36 : index
    %c0_117 = arith.constant 0 : index
    %234 = vector.load %arg4[%c36, %c0_117] : memref<39x16xf32, #tpu.memory_space<vmem>>, vector<2x16xf32>
    %cst_118 = arith.constant dense<0.000000e+00> : vector<12x2xf32>
    %235 = tpu.matmul %233, %234, %cst_118 {dimension_numbers = #tpu.dot_dimension_numbers<[1], [1], [0], [0], [0, 0, 1, 0], [], []>} : vector<12x16xf32>, vector<2x16xf32>, vector<12x2xf32> -> vector<12x2xf32>
    %c38 = arith.constant 38 : index
    %c0_119 = arith.constant 0 : index
    %236 = vector.load %arg4[%c38, %c0_119] : memref<39x16xf32, #tpu.memory_space<vmem>>, vector<1x16xf32>
    %237 = vector.extract_strided_slice %236 {offsets = [0, 0], sizes = [1, 2], strides = [1, 1]} : vector<1x16xf32> to vector<1x2xf32>
    %238 = vector.broadcast %237 : vector<1x2xf32> to vector<12x2xf32>
    %239 = arith.addf %235, %238 : vector<12x2xf32>
    %cst_120 = arith.constant dense<0xFF800000> : vector<12xf32>
    %240 = vector.multi_reduction <maximumf>, %239, %cst_120 [1] : vector<12x2xf32> to vector<12xf32>
    %241 = vector.shape_cast %240 : vector<12xf32> to vector<12x1xf32>
    %242 = vector.broadcast %241 : vector<12x1xf32> to vector<12x2xf32>
    %243 = arith.subf %239, %242 : vector<12x2xf32>
    %244 = math.exp %243 : vector<12x2xf32>
    %cst_121 = arith.constant dense<0.000000e+00> : vector<12xf32>
    %245 = vector.multi_reduction <add>, %244, %cst_121 [1] : vector<12x2xf32> to vector<12xf32>
    %246 = vector.shape_cast %245 : vector<12xf32> to vector<12x1xf32>
    %247 = tpu.reciprocal %246 {approx = true} : vector<12x1xf32> -> vector<12x1xf32>
    %248 = vector.broadcast %247 : vector<12x1xf32> to vector<12x2xf32>
    %249 = arith.mulf %244, %248 : vector<12x2xf32>
    %c0_122 = arith.constant 0 : index
    %c0_123 = arith.constant 0 : index
    %250 = vector.load %arg7[%c0_122, %c0_123] : memref<12x2xf32, #tpu.memory_space<vmem>>, vector<12x2xf32>
    tpu.vector_store %arg7[%c0_122, %c0_123], %249 {strides = array<i32>} : memref<12x2xf32, #tpu.memory_space<vmem>>, vector<12x2xf32>,
    %251 = math.log %246 : vector<12x1xf32>
    %252 = vector.broadcast %251 : vector<12x1xf32> to vector<12x2xf32>
    %253 = arith.subf %243, %252 : vector<12x2xf32>
    %c0_124 = arith.constant 0 : index
    %c0_125 = arith.constant 0 : index
    %254 = vector.load %arg6[%c0_124, %c0_125] : memref<12x2xf32, #tpu.memory_space<vmem>>, vector<12x2xf32>
    %cst_126 = arith.constant 0.000000e+00 : f32
    %255 = vector.broadcast %cst_126 : f32 to vector<12x2xf32>
    %256 = arith.subf %255, %253 : vector<12x2xf32>
    %257 = arith.mulf %254, %256 : vector<12x2xf32>
    %258 = vector.shape_cast %257 : vector<12x2xf32> to vector<1x12x2xf32>
    %cst_127 = arith.constant dense<0.000000e+00> : vector<1xf32>
    %259 = vector.multi_reduction <add>, %258, %cst_127 [1, 2] : vector<1x12x2xf32> to vector<1xf32>
    %260 = vector.shape_cast %259 : vector<1xf32> to vector<1x1x1xf32>
    %261 = vector.extract %260[0, 0, 0] : f32 from vector<1x1x1xf32>
    %262 = vector.broadcast %261 : f32 to vector<1x1xf32>
    %263 = vector.shape_cast %254 : vector<12x2xf32> to vector<1x12x2xf32>
    %cst_128 = arith.constant dense<0.000000e+00> : vector<1xf32>
    %264 = vector.multi_reduction <add>, %263, %cst_128 [1, 2] : vector<1x12x2xf32> to vector<1xf32>
    %265 = vector.shape_cast %264 : vector<1xf32> to vector<1x1x1xf32>
    %266 = vector.extract %265[0, 0, 0] : f32 from vector<1x1x1xf32>
    %267 = vector.broadcast %266 : f32 to vector<1x1xf32>
    %268 = arith.divf %262, %267 : vector<1x1xf32>
    %c0_129 = arith.constant 0 : index
    %c0_130 = arith.constant 0 : index
    %269 = vector.load %arg8[%c0_129, %c0_130] : memref<1x1xf32, #tpu.memory_space<vmem>>, vector<1x1xf32>
    tpu.vector_store %arg8[%c0_129, %c0_130], %268 {strides = array<i32>} : memref<1x1xf32, #tpu.memory_space<vmem>>, vector<1x1xf32>,
    return
  }
}

</mosaic_0001>

<llo_original>
// kernel: gat_uni_layer_bi_proj_forward.1
$region0: #{gat_uni_layer_bi_proj_forward.1}
  #allocation0 [shape = 'u32[]', space=smem, size = 0x4, offset = 0x4, fixed_abs, tag = 'smem constant byte address 0x4 - core index']
  #allocation1 [shape = 'u32[144,128]{1,0:T(1,128)}', space=vmem, size = 0x12000, scoped, tag = 'internal scratch']
  #allocation2 [shape = 'f32[16,64]{1,0:T(8,128)}', space=vmem, size = 0x2000, scoped, tag = 'scratch operand']
  #allocation3 [shape = 'f32[64,16]{1,0:T(8,128)}', space=vmem, size = 0x8000, scoped, tag = 'scratch operand']
  %s0 = inlined_call_operand.vmem [shape: f32[16,32], index: 0, kind: input, shape index: {}]
  %s1 = inlined_call_operand.vmem [shape: f32[16,16], index: 1, kind: input, shape index: {}]
  %s2 = inlined_call_operand.vmem [shape: f32[4,32,16], index: 2, kind: input, shape index: {}]
  %s3 = inlined_call_operand.vmem [shape: f32[2,4,32], index: 3, kind: input, shape index: {}]
  %s4 = inlined_call_operand.vmem [shape: f32[39,16], index: 4, kind: input, shape index: {}]
  %s5 = inlined_call_operand.vmem [shape: f32[2,12,16], index: 5, kind: input, shape index: {}]
  %s6 = inlined_call_operand.vmem [shape: f32[12,2], index: 6, kind: input, shape index: {}]
  %s7 = inlined_call_operand.vmem [shape: f32[12,2], index: 7, kind: output, shape index: {0}]
  %s8 = inlined_call_operand.hbm [shape: f32[1,1], index: 8, kind: output, shape index: {1}]
  %9 = xla_tuple %s7, %s8
  %s10 = sld [smem:[#allocation0]]
  $region46: #{gat_uni_layer_bi_proj_forward.1} parent=0
    _
  %s12 = ssub.s32 1, %s10
  %s13 = scalar_select 0, %s12, %s10
  $region1: #{gat_uni_layer_bi_proj_forward.1} parent=0
    #allocation4 [shape = 'u8[512]{0}', space=vmem, size = 0x400, scoped, tag = 'output window, operand 1, single buffered']
    #allocation5 [shape = 's32[1]{0}', space=sflag, size = 0x4, scoped, tag = 'scoped memory for gat_uni_layer_bi_proj_forward.1']
    %14 = vsyncpa [#allocation5], 0
    // Predicated region
    $region2: #{gat_uni_layer_bi_proj_forward.1} parent=1 // pred_check
      _
    $region3: #{gat_uni_layer_bi_proj_forward.1} parent=1 // pred_check_branch
      %16 = sbr.rel (0) target = $region5
    $region4: #{gat_uni_layer_bi_proj_forward.1} parent=1 // pred_region
      _
    $region5: #{gat_uni_layer_bi_proj_forward.1} parent=1 // pred_fallthru
      _
    // Predicated region
    $region6: #{gat_uni_layer_bi_proj_forward.1} parent=1 // pred_check
      _
    $region7: #{gat_uni_layer_bi_proj_forward.1} parent=1 // pred_check_branch
      %18 = sbr.rel (0) target = $region9
    $region8: #{gat_uni_layer_bi_proj_forward.1} parent=1 // pred_region
      _
    $region9: #{gat_uni_layer_bi_proj_forward.1} parent=1 // pred_fallthru
      _
    // Predicated region
    $region10: #{gat_uni_layer_bi_proj_forward.1} parent=1 // pred_check
      _
    $region11: #{gat_uni_layer_bi_proj_forward.1} parent=1 // pred_check_branch
      %20 = sbr.rel (0) target = $region13
    $region12: #{gat_uni_layer_bi_proj_forward.1} parent=1 // pred_region
      _
    $region13: #{gat_uni_layer_bi_proj_forward.1} parent=1 // pred_fallthru
      _
    // Predicated region
    $region14: #{gat_uni_layer_bi_proj_forward.1} parent=1 // pred_check
      _
    $region15: #{gat_uni_layer_bi_proj_forward.1} parent=1 // pred_check_branch
      %22 = sbr.rel (0) target = $region17
    $region16: #{gat_uni_layer_bi_proj_forward.1} parent=1 // pred_region
      _
    $region17: #{gat_uni_layer_bi_proj_forward.1} parent=1 // pred_fallthru
      _
    // Predicated region
    $region18: #{gat_uni_layer_bi_proj_forward.1} parent=1 // pred_check
      _
    $region19: #{gat_uni_layer_bi_proj_forward.1} parent=1 // pred_check_branch
      %24 = sbr.rel (0) target = $region21
    $region20: #{gat_uni_layer_bi_proj_forward.1} parent=1 // pred_region
      _
    $region21: #{gat_uni_layer_bi_proj_forward.1} parent=1 // pred_fallthru
      _
    // Predicated region
    $region22: #{gat_uni_layer_bi_proj_forward.1} parent=1 // pred_check
      _
    $region23: #{gat_uni_layer_bi_proj_forward.1} parent=1 // pred_check_branch
      %26 = sbr.rel (0) target = $region25
    $region24: #{gat_uni_layer_bi_proj_forward.1} parent=1 // pred_region
      _
    $region25: #{gat_uni_layer_bi_proj_forward.1} parent=1 // pred_fallthru
      _
    // Predicated region
    $region26: #{gat_uni_layer_bi_proj_forward.1} parent=1 // pred_check
      _
    $region27: #{gat_uni_layer_bi_proj_forward.1} parent=1 // pred_check_branch
      %28 = sbr.rel (0) target = $region29
    $region28: #{gat_uni_layer_bi_proj_forward.1} parent=1 // pred_region
      _
    $region29: #{gat_uni_layer_bi_proj_forward.1} parent=1 // pred_fallthru
      _
    %v29 = vld [vmem:[%s0] sm:$0xff]
    %v30 = vld [vmem:[%s0 + $0x8] sm:$0xff]
    %v31 = vld [vmem:[%s1] sm:$0xff]
    %v32 = vld [vmem:[%s1 + $0x8] sm:$0xff]
    %v33 = vld [vmem:[%s3] sm:$0xf]
    %vm34 = vcmask 261120
    %v36 = vsel %vm34, %v33, 0
    %v39 = vsel %vm34, %v29, 0
    %v42 = vsel %vm34, %v30, 0
    %44 = vmatprep.subr.mxu0 0.0
    %45 = vmatpush1.xpose.msra.mxu0 0.0
    %46 = vmatprep.subr.mxu0 0.0
    %47 = vmatpush1.xpose.msra.mxu0 0.0
    %48 = vmatprep.subr.mxu0 0.0
    %49 = vmatpush1.xpose.msra.mxu0 0.0
    %50 = vmatprep.subr.mxu0 0.0
    %51 = vmatpush1.xpose.msra.mxu0 0.0
    %52 = vmatprep.subr.mxu0 0.0
    %53 = vmatpush1.xpose.msra.mxu0 0.0
    %54 = vmatprep.subr.mxu0 0.0
    %55 = vmatpush1.xpose.msra.mxu0 0.0
    %56 = vmatprep.subr.mxu0 0.0
    %57 = vmatpush1.xpose.msra.mxu0 0.0
    %58 = vmatprep.subr.mxu0 0.0
    %59 = vmatpush1.xpose.msra.mxu0 0.0
    %60 = vmatprep.subr.mxu0 0.0
    %61 = vmatpush1.xpose.msra.mxu0 0.0
    %62 = vmatprep.subr.mxu0 0.0
    %63 = vmatpush1.xpose.msra.mxu0 0.0
    %64 = vmatprep.subr.mxu0 0.0
    %65 = vmatpush1.xpose.msra.mxu0 0.0
    %66 = vmatprep.subr.mxu0 0.0
    %67 = vmatpush1.xpose.msra.mxu0 0.0
    %68 = vmatprep.subr.mxu0 0.0
    %69 = vmatpush1.xpose.msra.mxu0 0.0
    %70 = vmatprep.subr.mxu0 0.0
    %71 = vmatpush1.xpose.msra.mxu0 0.0
    %72 = vmatprep.subr.mxu0 0.0
    %73 = vmatpush1.xpose.msra.mxu0 %v42
    %74 = vmatprep.subr.mxu0 0.0
    %75 = vmatpush1.xpose.msra.mxu0 %v39
    %76 = vmatprep.subr.mxu0 0.0
    %77 = vmatpush2.xpose.msra.mxu0 0.0
    %78 = vmatprep.subr.mxu0 0.0
    %79 = vmatpush2.xpose.msra.mxu0 0.0
    %80 = vmatprep.subr.mxu0 0.0
    %81 = vmatpush2.xpose.msra.mxu0 0.0
    %82 = vmatprep.subr.mxu0 0.0
    %83 = vmatpush2.xpose.msra.mxu0 0.0
    %84 = vmatprep.subr.mxu0 0.0
    %85 = vmatpush2.xpose.msra.mxu0 0.0
    %86 = vmatprep.subr.mxu0 0.0
    %87 = vmatpush2.xpose.msra.mxu0 0.0
    %88 = vmatprep.subr.mxu0 0.0
    %89 = vmatpush2.xpose.msra.mxu0 0.0
    %90 = vmatprep.subr.mxu0 0.0
    %91 = vmatpush2.xpose.msra.mxu0 0.0
    %92 = vmatprep.subr.mxu0 0.0
    %93 = vmatpush2.xpose.msra.mxu0 0.0
    %94 = vmatprep.subr.mxu0 0.0
    %95 = vmatpush2.xpose.msra.mxu0 0.0
    %96 = vmatprep.subr.mxu0 0.0
    %97 = vmatpush2.xpose.msra.mxu0 0.0
    %98 = vmatprep.subr.mxu0 0.0
    %99 = vmatpush2.xpose.msra.mxu0 0.0
    %100 = vmatprep.subr.mxu0 0.0
    %101 = vmatpush2.xpose.msra.mxu0 0.0
    %102 = vmatprep.subr.mxu0 0.0
    %103 = vmatpush2.xpose.msra.mxu0 0.0
    %104 = vmatprep.subr.mxu0 0.0
    %105 = vmatpush2.xpose.msra.mxu0 0.0
    %106 = vmatprep.subr.mxu0 0.0
    %107 = vmatpush2.xpose.msra.mxu0 0.0
    %108 = vmatprep.mubr.f32.mxu0 0.0
    %109 = vmatmul.mubr.f32.gmra.mxu0 %v36
    %v110 = vpop.f32.mrf.mxu0
    %v111 = vadd.f32 0.0, %v110
    %v112 = vpop.f32.mrf.mxu0
    %113 = vdwg.mxu0
    %s114 = scalar_lea.vmem %s3, 4
    %v115 = vld [vmem:[%s114] sm:$0xf]
    %v117 = vsel %vm34, %v115, 0
    %119 = vmatprep.subr.mxu0 0.0
    %120 = vmatpush1.xpose.msra.mxu0 0.0
    %121 = vmatprep.subr.mxu0 0.0
    %122 = vmatpush1.xpose.msra.mxu0 0.0
    %123 = vmatprep.subr.mxu0 0.0
    %124 = vmatpush1.xpose.msra.mxu0 0.0
    %125 = vmatprep.subr.mxu0 0.0
    %126 = vmatpush1.xpose.msra.mxu0 0.0
    %127 = vmatprep.subr.mxu0 0.0
    %128 = vmatpush1.xpose.msra.mxu0 0.0
    %129 = vmatprep.subr.mxu0 0.0
    %130 = vmatpush1.xpose.msra.mxu0 0.0
    %131 = vmatprep.subr.mxu0 0.0
    %132 = vmatpush1.xpose.msra.mxu0 0.0
    %133 = vmatprep.subr.mxu0 0.0
    %134 = vmatpush1.xpose.msra.mxu0 0.0
    %135 = vmatprep.subr.mxu0 0.0
    %136 = vmatpush1.xpose.msra.mxu0 0.0
    %137 = vmatprep.subr.mxu0 0.0
    %138 = vmatpush1.xpose.msra.mxu0 0.0
    %139 = vmatprep.subr.mxu0 0.0
    %140 = vmatpush1.xpose.msra.mxu0 0.0
    %141 = vmatprep.subr.mxu0 0.0
    %142 = vmatpush1.xpose.msra.mxu0 0.0
    %143 = vmatprep.subr.mxu0 0.0
    %144 = vmatpush1.xpose.msra.mxu0 0.0
    %145 = vmatprep.subr.mxu0 0.0
    %146 = vmatpush1.xpose.msra.mxu0 0.0
    %147 = vmatprep.subr.mxu0 0.0
    %148 = vmatpush1.xpose.msra.mxu0 0.0
    %149 = vmatprep.subr.mxu0 0.0
    %150 = vmatpush1.xpose.msra.mxu0 %v117
    %151 = vmatprep.subr.mxu0 0.0
    %152 = vmatpush2.xpose.msra.mxu0 0.0
    %153 = vmatprep.subr.mxu0 0.0
    %154 = vmatpush2.xpose.msra.mxu0 0.0
    %155 = vmatprep.subr.mxu0 0.0
    %156 = vmatpush2.xpose.msra.mxu0 0.0
    %157 = vmatprep.subr.mxu0 0.0
    %158 = vmatpush2.xpose.msra.mxu0 0.0
    %159 = vmatprep.subr.mxu0 0.0
    %160 = vmatpush2.xpose.msra.mxu0 0.0
    %161 = vmatprep.subr.mxu0 0.0
    %162 = vmatpush2.xpose.msra.mxu0 0.0
    %163 = vmatprep.subr.mxu0 0.0
    %164 = vmatpush2.xpose.msra.mxu0 0.0
    %165 = vmatprep.subr.mxu0 0.0
    %166 = vmatpush2.xpose.msra.mxu0 0.0
    %167 = vmatprep.subr.mxu0 0.0
    %168 = vmatpush2.xpose.msra.mxu0 0.0
    %169 = vmatprep.subr.mxu0 0.0
    %170 = vmatpush2.xpose.msra.mxu0 0.0
    %171 = vmatprep.subr.mxu0 0.0
    %172 = vmatpush2.xpose.msra.mxu0 0.0
    %173 = vmatprep.subr.mxu0 0.0
    %174 = vmatpush2.xpose.msra.mxu0 0.0
    %175 = vmatprep.subr.mxu0 0.0
    %176 = vmatpush2.xpose.msra.mxu0 0.0
    %177 = vmatprep.subr.mxu0 0.0
    %178 = vmatpush2.xpose.msra.mxu0 0.0
    %179 = vmatprep.subr.mxu0 0.0
    %180 = vmatpush2.xpose.msra.mxu0 0.0
    %181 = vmatprep.subr.mxu0 0.0
    %182 = vmatpush2.xpose.msra.mxu0 0.0
    %183 = vmatprep.mubr.f32.mxu0 0.0
    %184 = vmatmul.mubr.f32.gmra.mxu0 %v39
    %v185 = vpop.f32.mrf.mxu0
    %v186 = vadd.f32 0.0, %v185
    %v187 = vpop.f32.mrf.mxu0
    %188 = vmatprep.mubr.f32.mxu0 0.0
    %189 = vmatmul.mubr.f32.gmra.mxu0 %v42
    %v190 = vpop.f32.mrf.mxu0
    %v191 = vadd.f32 0.0, %v190
    %v192 = vpop.f32.mrf.mxu0
    %193 = vdwg.mxu0
    %v194 = vld [vmem:[%s2] sm:$0xff]
    %v195 = vld [vmem:[%s2 + $0x8] sm:$0xff]
    %v196 = vld [vmem:[%s2 + $0x10] sm:$0xff]
    %v197 = vld [vmem:[%s2 + $0x18] sm:$0xff]
    %198 = vmatprep.subr.mxu0 0.0
    %199 = vmatpush1.msra.mxu0 0.0
    %200 = vmatprep.subr.mxu0 0.0
    %201 = vmatpush1.msra.mxu0 0.0
    %202 = vmatprep.subr.mxu0 0.0
    %203 = vmatpush1.msra.mxu0 0.0
    %204 = vmatprep.subr.mxu0 0.0
    %205 = vmatpush1.msra.mxu0 0.0
    %206 = vmatprep.subr.mxu0 0.0
    %207 = vmatpush1.msra.mxu0 0.0
    %208 = vmatprep.subr.mxu0 0.0
    %209 = vmatpush1.msra.mxu0 0.0
    %210 = vmatprep.subr.mxu0 0.0
    %211 = vmatpush1.msra.mxu0 0.0
    %212 = vmatprep.subr.mxu0 0.0
    %213 = vmatpush1.msra.mxu0 0.0
    %214 = vmatprep.subr.mxu0 0.0
    %215 = vmatpush1.msra.mxu0 0.0
    %216 = vmatprep.subr.mxu0 0.0
    %217 = vmatpush1.msra.mxu0 0.0
    %218 = vmatprep.subr.mxu0 0.0
    %219 = vmatpush1.msra.mxu0 0.0
    %220 = vmatprep.subr.mxu0 0.0
    %221 = vmatpush1.msra.mxu0 0.0
    %222 = vmatprep.subr.mxu0 0.0
    %223 = vmatpush1.msra.mxu0 %v197
    %224 = vmatprep.subr.mxu0 0.0
    %225 = vmatpush1.msra.mxu0 %v196
    %226 = vmatprep.subr.mxu0 0.0
    %227 = vmatpush1.msra.mxu0 %v195
    %228 = vmatprep.subr.mxu0 0.0
    %229 = vmatpush1.msra.mxu0 %v194
    %230 = vmatprep.subr.mxu0 0.0
    %231 = vmatpush2.msra.mxu0 0.0
    %232 = vmatprep.subr.mxu0 0.0
    %233 = vmatpush2.msra.mxu0 0.0
    %234 = vmatprep.subr.mxu0 0.0
    %235 = vmatpush2.msra.mxu0 0.0
    %236 = vmatprep.subr.mxu0 0.0
    %237 = vmatpush2.msra.mxu0 0.0
    %238 = vmatprep.subr.mxu0 0.0
    %239 = vmatpush2.msra.mxu0 0.0
    %240 = vmatprep.subr.mxu0 0.0
    %241 = vmatpush2.msra.mxu0 0.0
    %242 = vmatprep.subr.mxu0 0.0
    %243 = vmatpush2.msra.mxu0 0.0
    %244 = vmatprep.subr.mxu0 0.0
    %245 = vmatpush2.msra.mxu0 0.0
    %246 = vmatprep.subr.mxu0 0.0
    %247 = vmatpush2.msra.mxu0 0.0
    %248 = vmatprep.subr.mxu0 0.0
    %249 = vmatpush2.msra.mxu0 0.0
    %250 = vmatprep.subr.mxu0 0.0
    %251 = vmatpush2.msra.mxu0 0.0
    %252 = vmatprep.subr.mxu0 0.0
    %253 = vmatpush2.msra.mxu0 0.0
    %254 = vmatprep.subr.mxu0 0.0
    %255 = vmatpush2.msra.mxu0 0.0
    %256 = vmatprep.subr.mxu0 0.0
    %257 = vmatpush2.msra.mxu0 0.0
    %258 = vmatprep.subr.mxu0 0.0
    %259 = vmatpush2.msra.mxu0 0.0
    %260 = vmatprep.subr.mxu0 0.0
    %261 = vmatpush2.msra.mxu0 0.0
    %262 = vmatprep.mubr.f32.mxu0 0.0
    %263 = vmatmul.mubr.f32.gmra.mxu0 %v39
    %v264 = vpop.f32.mrf.mxu0
    %v265 = vadd.f32 0.0, %v264
    %v266 = vpop.f32.mrf.mxu0
    %267 = vmatprep.mubr.f32.mxu0 0.0
    %268 = vmatmul.mubr.f32.gmra.mxu0 %v42
    %v269 = vpop.f32.mrf.mxu0
    %v270 = vadd.f32 0.0, %v269
    %v271 = vpop.f32.mrf.mxu0
    %272 = vdwg.mxu0
    %274 = vset.pattern.permute.xlu0 0
    %275 = vperm.xlu0 %274, %v186
    %v276 = vpop.permute.xlu0 %275
    %279 = vset.pattern.permute.xlu0 0
    %280 = vperm.xlu0 %279, %v191
    %v281 = vpop.permute.xlu0 %280
    %v283 = vlaneseq
    %v284 = vshrl.u32 %v283, 7
    %v285 = vsub.s32 0, %v284
    %v286 = vrot.slane %v111, %v285
    %v287 = vadd.f32 %v276, %v286
    %v288 = vadd.f32 %v281, %v286
    %vm289 = vcmp.gt.f32.partialorder %v287, 0.0
    %vm290 = vcmp.gt.f32.partialorder %v288, 0.0
    %v291 = vmul.f32 %v287, 0.2
    %v292 = vmul.f32 %v288, 0.2
    %v293 = vsel %vm289, %v287, %v291
    %v294 = vsel %vm290, %v288, %v292
    %vm295 = vcmp.gt.f32.partialorder %v31, 0.0
    %vm296 = vcmp.gt.f32.partialorder %v32, 0.0
    %v297 = vsel %vm295, %v293, -1e+30
    %v298 = vsel %vm296, %v294, -1e+30
    %vm299 = vcmask 130048
    %v300 = vsel %vm299, %v297, -inf
    %301 = vmax.xlane.f32.xlu0 %v300
    %v302 = vpop.xlane.xlu0 %301
    %v303 = vsel %vm299, %v298, -inf
    %304 = vmax.xlane.f32.xlu0 %v303
    %v305 = vpop.xlane.xlu0 %304
    %v306 = vsub.f32 %v297, %v302
    %v307 = vsub.f32 %v298, %v305
    %v308 = vmul.f32 %v306, 1.442695
    %v309 = vpow.pop %v308
    %v310 = vmul.f32 %v307, 1.442695
    %v311 = vpow.pop %v310
    %v312 = vsel %vm299, %v309, 0.0
    %313 = vadd.xlane.f32.xlu0 %v312
    %v314 = vpop.xlane.xlu0 %313
    %v315 = vsel %vm299, %v311, 0.0
    %316 = vadd.xlane.f32.xlu0 %v315
    %v317 = vpop.xlane.xlu0 %316
    %v318 = vrcp.pop %v314
    %v319 = vrcp.pop %v317
    %v320 = vmul.f32 %v309, %v318
    %v321 = vmul.f32 %v311, %v319
    %322 = vst.msk [vmem:[#allocation2] sm:$0xff] %vm299, %v320
    %323 = vst.msk [vmem:[#allocation2 + $0x8] sm:$0xff] %vm299, %v321
    %324 = vst.msk [vmem:[#allocation3] sm:$0xff] %vm299, %v265
    %325 = vst.msk [vmem:[#allocation3 + $0x8] sm:$0xff] %vm299, %v270
    %s326 = scalar_lea.vmem %s2, 32
    %v327 = vld [vmem:[%s326] sm:$0xff]
    %v328 = vld [vmem:[%s326 + $0x8] sm:$0xff]
    %v329 = vld [vmem:[%s326 + $0x10] sm:$0xff]
    %v330 = vld [vmem:[%s326 + $0x18] sm:$0xff]
    %331 = vmatprep.subr.mxu0 0.0
    %332 = vmatpush1.msra.mxu0 0.0
    %333 = vmatprep.subr.mxu0 0.0
    %334 = vmatpush1.msra.mxu0 0.0
    %335 = vmatprep.subr.mxu0 0.0
    %336 = vmatpush1.msra.mxu0 0.0
    %337 = vmatprep.subr.mxu0 0.0
    %338 = vmatpush1.msra.mxu0 0.0
    %339 = vmatprep.subr.mxu0 0.0
    %340 = vmatpush1.msra.mxu0 0.0
    %341 = vmatprep.subr.mxu0 0.0
    %342 = vmatpush1.msra.mxu0 0.0
    %343 = vmatprep.subr.mxu0 0.0
    %344 = vmatpush1.msra.mxu0 0.0
    %345 = vmatprep.subr.mxu0 0.0
    %346 = vmatpush1.msra.mxu0 0.0
    %347 = vmatprep.subr.mxu0 0.0
    %348 = vmatpush1.msra.mxu0 0.0
    %349 = vmatprep.subr.mxu0 0.0
    %350 = vmatpush1.msra.mxu0 0.0
    %351 = vmatprep.subr.mxu0 0.0
    %352 = vmatpush1.msra.mxu0 0.0
    %353 = vmatprep.subr.mxu0 0.0
    %354 = vmatpush1.msra.mxu0 0.0
    %355 = vmatprep.subr.mxu0 0.0
    %356 = vmatpush1.msra.mxu0 %v330
    %357 = vmatprep.subr.mxu0 0.0
    %358 = vmatpush1.msra.mxu0 %v329
    %359 = vmatprep.subr.mxu0 0.0
    %360 = vmatpush1.msra.mxu0 %v328
    %361 = vmatprep.subr.mxu0 0.0
    %362 = vmatpush1.msra.mxu0 %v327
    %363 = vmatprep.subr.mxu0 0.0
    %364 = vmatpush2.msra.mxu0 0.0
    %365 = vmatprep.subr.mxu0 0.0
    %366 = vmatpush2.msra.mxu0 0.0
    %367 = vmatprep.subr.mxu0 0.0
    %368 = vmatpush2.msra.mxu0 0.0
    %369 = vmatprep.subr.mxu0 0.0
    %370 = vmatpush2.msra.mxu0 0.0
    %371 = vmatprep.subr.mxu0 0.0
    %372 = vmatpush2.msra.mxu0 0.0
    %373 = vmatprep.subr.mxu0 0.0
    %374 = vmatpush2.msra.mxu0 0.0
    %375 = vmatprep.subr.mxu0 0.0
    %376 = vmatpush2.msra.mxu0 0.0
    %377 = vmatprep.subr.mxu0 0.0
    %378 = vmatpush2.msra.mxu0 0.0
    %379 = vmatprep.subr.mxu0 0.0
    %380 = vmatpush2.msra.mxu0 0.0
    %381 = vmatprep.subr.mxu0 0.0
    %382 = vmatpush2.msra.mxu0 0.0
    %383 = vmatprep.subr.mxu0 0.0
    %384 = vmatpush2.msra.mxu0 0.0
    %385 = vmatprep.subr.mxu0 0.0
    %386 = vmatpush2.msra.mxu0 0.0
    %387 = vmatprep.subr.mxu0 0.0
    %388 = vmatpush2.msra.mxu0 0.0
    %389 = vmatprep.subr.mxu0 0.0
    %390 = vmatpush2.msra.mxu0 0.0
    %391 = vmatprep.subr.mxu0 0.0
    %392 = vmatpush2.msra.mxu0 0.0
    %393 = vmatprep.subr.mxu0 0.0
    %394 = vmatpush2.msra.mxu0 0.0
    %395 = vmatprep.mubr.f32.mxu0 0.0
    %396 = vmatmul.mubr.f32.gmra.mxu0 %v39
    %v397 = vpop.f32.mrf.mxu0
    %v398 = vadd.f32 0.0, %v397
    %v399 = vpop.f32.mrf.mxu0
    %400 = vmatprep.mubr.f32.mxu0 0.0
    %401 = vmatmul.mubr.f32.gmra.mxu0 %v42
    %v402 = vpop.f32.mrf.mxu0
    %v403 = vadd.f32 0.0, %v402
    %v404 = vpop.f32.mrf.mxu0
    %405 = vdwg.mxu0
    %406 = vset.pattern.permute.xlu0 1
    %407 = vperm.xlu0 %406, %v186
    %v408 = vpop.permute.xlu0 %407
    %410 = vset.pattern.permute.xlu0 1
    %411 = vperm.xlu0 %410, %v191
    %v412 = vpop.permute.xlu0 %411
    %v414 = vlaneseq
    %v415 = vshrl.u32 %v414, 7
    %v416 = vsub.s32 1, %v415
    %v417 = vrot.slane %v111, %v416
    %v418 = vadd.f32 %v408, %v417
    %v419 = vadd.f32 %v412, %v417
    %vm420 = vcmp.gt.f32.partialorder %v418, 0.0
    %vm421 = vcmp.gt.f32.partialorder %v419, 0.0
    %v422 = vmul.f32 %v418, 0.2
    %v423 = vmul.f32 %v419, 0.2
    %v424 = vsel %vm420, %v418, %v422
    %v425 = vsel %vm421, %v419, %v423
    %v426 = vsel %vm295, %v424, -1e+30
    %v427 = vsel %vm296, %v425, -1e+30
    %v428 = vsel %vm299, %v426, -inf
    %429 = vmax.xlane.f32.xlu0 %v428
    %v430 = vpop.xlane.xlu0 %429
    %v431 = vsel %vm299, %v427, -inf
    %432 = vmax.xlane.f32.xlu0 %v431
    %v433 = vpop.xlane.xlu0 %432
    %v434 = vsub.f32 %v426, %v430
    %v435 = vsub.f32 %v427, %v433
    %v436 = vmul.f32 %v434, 1.442695
    %v437 = vpow.pop %v436
    %v438 = vmul.f32 %v435, 1.442695
    %v439 = vpow.pop %v438
    %v440 = vsel %vm299, %v437, 0.0
    %441 = vadd.xlane.f32.xlu0 %v440
    %v442 = vpop.xlane.xlu0 %441
    %v443 = vsel %vm299, %v439, 0.0
    %444 = vadd.xlane.f32.xlu0 %v443
    %v445 = vpop.xlane.xlu0 %444
    %v446 = vrcp.pop %v442
    %v447 = vrcp.pop %v445
    %v448 = vmul.f32 %v437, %v446
    %v449 = vmul.f32 %v439, %v447
    %452 = vrot.lane.b32.xlu0 %v448, 16
    %v453 = vpop.permute.xlu0 %452
    %454 = vrot.lane.b32.xlu0 %v449, 16
    %v455 = vpop.permute.xlu0 %454
    %vm458 = vcmask 261248
    %459 = vst.msk [vmem:[#allocation2] sm:$0xff] %vm458, %v453
    %460 = vst.msk [vmem:[#allocation2 + $0x8] sm:$0xff] %vm458, %v455
    %461 = vst.msk [vmem:[#allocation3 + $0x10] sm:$0xff] %vm299, %v398
    %462 = vst.msk [vmem:[#allocation3 + $0x18] sm:$0xff] %vm299, %v403
    %s463 = scalar_lea.vmem %s2, 64
    %v464 = vld [vmem:[%s463] sm:$0xff]
    %v465 = vld [vmem:[%s463 + $0x8] sm:$0xff]
    %v466 = vld [vmem:[%s463 + $0x10] sm:$0xff]
    %v467 = vld [vmem:[%s463 + $0x18] sm:$0xff]
    %468 = vmatprep.subr.mxu0 0.0
    %469 = vmatpush1.msra.mxu0 0.0
    %470 = vmatprep.subr.mxu0 0.0
    %471 = vmatpush1.msra.mxu0 0.0
    %472 = vmatprep.subr.mxu0 0.0
    %473 = vmatpush1.msra.mxu0 0.0
    %474 = vmatprep.subr.mxu0 0.0
    %475 = vmatpush1.msra.mxu0 0.0
    %476 = vmatprep.subr.mxu0 0.0
    %477 = vmatpush1.msra.mxu0 0.0
    %478 = vmatprep.subr.mxu0 0.0
    %479 = vmatpush1.msra.mxu0 0.0
    %480 = vmatprep.subr.mxu0 0.0
    %481 = vmatpush1.msra.mxu0 0.0
    %482 = vmatprep.subr.mxu0 0.0
    %483 = vmatpush1.msra.mxu0 0.0
    %484 = vmatprep.subr.mxu0 0.0
    %485 = vmatpush1.msra.mxu0 0.0
    %486 = vmatprep.subr.mxu0 0.0
    %487 = vmatpush1.msra.mxu0 0.0
    %488 = vmatprep.subr.mxu0 0.0
    %489 = vmatpush1.msra.mxu0 0.0
    %490 = vmatprep.subr.mxu0 0.0
    %491 = vmatpush1.msra.mxu0 0.0
    %492 = vmatprep.subr.mxu0 0.0
    %493 = vmatpush1.msra.mxu0 %v467
    %494 = vmatprep.subr.mxu0 0.0
    %495 = vmatpush1.msra.mxu0 %v466
    %496 = vmatprep.subr.mxu0 0.0
    %497 = vmatpush1.msra.mxu0 %v465
    %498 = vmatprep.subr.mxu0 0.0
    %499 = vmatpush1.msra.mxu0 %v464
    %500 = vmatprep.subr.mxu0 0.0
    %501 = vmatpush2.msra.mxu0 0.0
    %502 = vmatprep.subr.mxu0 0.0
    %503 = vmatpush2.msra.mxu0 0.0
    %504 = vmatprep.subr.mxu0 0.0
    %505 = vmatpush2.msra.mxu0 0.0
    %506 = vmatprep.subr.mxu0 0.0
    %507 = vmatpush2.msra.mxu0 0.0
    %508 = vmatprep.subr.mxu0 0.0
    %509 = vmatpush2.msra.mxu0 0.0
    %510 = vmatprep.subr.mxu0 0.0
    %511 = vmatpush2.msra.mxu0 0.0
    %512 = vmatprep.subr.mxu0 0.0
    %513 = vmatpush2.msra.mxu0 0.0
    %514 = vmatprep.subr.mxu0 0.0
    %515 = vmatpush2.msra.mxu0 0.0
    %516 = vmatprep.subr.mxu0 0.0
    %517 = vmatpush2.msra.mxu0 0.0
    %518 = vmatprep.subr.mxu0 0.0
    %519 = vmatpush2.msra.mxu0 0.0
    %520 = vmatprep.subr.mxu0 0.0
    %521 = vmatpush2.msra.mxu0 0.0
    %522 = vmatprep.subr.mxu0 0.0
    %523 = vmatpush2.msra.mxu0 0.0
    %524 = vmatprep.subr.mxu0 0.0
    %525 = vmatpush2.msra.mxu0 0.0
    %526 = vmatprep.subr.mxu0 0.0
    %527 = vmatpush2.msra.mxu0 0.0
    %528 = vmatprep.subr.mxu0 0.0
    %529 = vmatpush2.msra.mxu0 0.0
    %530 = vmatprep.subr.mxu0 0.0
    %531 = vmatpush2.msra.mxu0 0.0
    %532 = vmatprep.mubr.f32.mxu0 0.0
    %533 = vmatmul.mubr.f32.gmra.mxu0 %v39
    %v534 = vpop.f32.mrf.mxu0
    %v535 = vadd.f32 0.0, %v534
    %v536 = vpop.f32.mrf.mxu0
    %537 = vmatprep.mubr.f32.mxu0 0.0
    %538 = vmatmul.mubr.f32.gmra.mxu0 %v42
    %v539 = vpop.f32.mrf.mxu0
    %v540 = vadd.f32 0.0, %v539
    %v541 = vpop.f32.mrf.mxu0
    %542 = vdwg.mxu0
    %543 = vset.pattern.permute.xlu0 2
    %544 = vperm.xlu0 %543, %v186
    %v545 = vpop.permute.xlu0 %544
    %547 = vset.pattern.permute.xlu0 2
    %548 = vperm.xlu0 %547, %v191
    %v549 = vpop.permute.xlu0 %548
    %v551 = vlaneseq
    %v552 = vshrl.u32 %v551, 7
    %v553 = vsub.s32 2, %v552
    %v554 = vrot.slane %v111, %v553
    %v555 = vadd.f32 %v545, %v554
    %v556 = vadd.f32 %v549, %v554
    %vm557 = vcmp.gt.f32.partialorder %v555, 0.0
    %vm558 = vcmp.gt.f32.partialorder %v556, 0.0
    %v559 = vmul.f32 %v555, 0.2
    %v560 = vmul.f32 %v556, 0.2
    %v561 = vsel %vm557, %v555, %v559
    %v562 = vsel %vm558, %v556, %v560
    %v563 = vsel %vm295, %v561, -1e+30
    %v564 = vsel %vm296, %v562, -1e+30
    %v565 = vsel %vm299, %v563, -inf
    %566 = vmax.xlane.f32.xlu0 %v565
    %v567 = vpop.xlane.xlu0 %566
    %v568 = vsel %vm299, %v564, -inf
    %569 = vmax.xlane.f32.xlu0 %v568
    %v570 = vpop.xlane.xlu0 %569
    %v571 = vsub.f32 %v563, %v567
    %v572 = vsub.f32 %v564, %v570
    %v573 = vmul.f32 %v571, 1.442695
    %v574 = vpow.pop %v573
    %v575 = vmul.f32 %v572, 1.442695
    %v576 = vpow.pop %v575
    %v577 = vsel %vm299, %v574, 0.0
    %578 = vadd.xlane.f32.xlu0 %v577
    %v579 = vpop.xlane.xlu0 %578
    %v580 = vsel %vm299, %v576, 0.0
    %581 = vadd.xlane.f32.xlu0 %v580
    %v582 = vpop.xlane.xlu0 %581
    %v583 = vrcp.pop %v579
    %v584 = vrcp.pop %v582
    %v585 = vmul.f32 %v574, %v583
    %v586 = vmul.f32 %v576, %v584
    %589 = vrot.lane.b32.xlu0 %v585, 32
    %v590 = vpop.permute.xlu0 %589
    %591 = vrot.lane.b32.xlu0 %v586, 32
    %v592 = vpop.permute.xlu0 %591
    %vm595 = vcmask 392448
    %596 = vst.msk [vmem:[#allocation2] sm:$0xff] %vm595, %v590
    %597 = vst.msk [vmem:[#allocation2 + $0x8] sm:$0xff] %vm595, %v592
    %598 = vst.msk [vmem:[#allocation3 + $0x20] sm:$0xff] %vm299, %v535
    %599 = vst.msk [vmem:[#allocation3 + $0x28] sm:$0xff] %vm299, %v540
    %s600 = scalar_lea.vmem %s2, 96
    %v601 = vld [vmem:[%s600] sm:$0xff]
    %v602 = vld [vmem:[%s600 + $0x8] sm:$0xff]
    %v603 = vld [vmem:[%s600 + $0x10] sm:$0xff]
    %v604 = vld [vmem:[%s600 + $0x18] sm:$0xff]
    %605 = vmatprep.subr.mxu0 0.0
    %606 = vmatpush1.msra.mxu0 0.0
    %607 = vmatprep.subr.mxu0 0.0
    %608 = vmatpush1.msra.mxu0 0.0
    %609 = vmatprep.subr.mxu0 0.0
    %610 = vmatpush1.msra.mxu0 0.0
    %611 = vmatprep.subr.mxu0 0.0
    %612 = vmatpush1.msra.mxu0 0.0
    %613 = vmatprep.subr.mxu0 0.0
    %614 = vmatpush1.msra.mxu0 0.0
    %615 = vmatprep.subr.mxu0 0.0
    %616 = vmatpush1.msra.mxu0 0.0
    %617 = vmatprep.subr.mxu0 0.0
    %618 = vmatpush1.msra.mxu0 0.0
    %619 = vmatprep.subr.mxu0 0.0
    %620 = vmatpush1.msra.mxu0 0.0
    %621 = vmatprep.subr.mxu0 0.0
    %622 = vmatpush1.msra.mxu0 0.0
    %623 = vmatprep.subr.mxu0 0.0
    %624 = vmatpush1.msra.mxu0 0.0
    %625 = vmatprep.subr.mxu0 0.0
    %626 = vmatpush1.msra.mxu0 0.0
    %627 = vmatprep.subr.mxu0 0.0
    %628 = vmatpush1.msra.mxu0 0.0
    %629 = vmatprep.subr.mxu0 0.0
    %630 = vmatpush1.msra.mxu0 %v604
    %631 = vmatprep.subr.mxu0 0.0
    %632 = vmatpush1.msra.mxu0 %v603
    %633 = vmatprep.subr.mxu0 0.0
    %634 = vmatpush1.msra.mxu0 %v602
    %635 = vmatprep.subr.mxu0 0.0
    %636 = vmatpush1.msra.mxu0 %v601
    %637 = vmatprep.subr.mxu0 0.0
    %638 = vmatpush2.msra.mxu0 0.0
    %639 = vmatprep.subr.mxu0 0.0
    %640 = vmatpush2.msra.mxu0 0.0
    %641 = vmatprep.subr.mxu0 0.0
    %642 = vmatpush2.msra.mxu0 0.0
    %643 = vmatprep.subr.mxu0 0.0
    %644 = vmatpush2.msra.mxu0 0.0
    %645 = vmatprep.subr.mxu0 0.0
    %646 = vmatpush2.msra.mxu0 0.0
    %647 = vmatprep.subr.mxu0 0.0
    %648 = vmatpush2.msra.mxu0 0.0
    %649 = vmatprep.subr.mxu0 0.0
    %650 = vmatpush2.msra.mxu0 0.0
    %651 = vmatprep.subr.mxu0 0.0
    %652 = vmatpush2.msra.mxu0 0.0
    %653 = vmatprep.subr.mxu0 0.0
    %654 = vmatpush2.msra.mxu0 0.0
    %655 = vmatprep.subr.mxu0 0.0
    %656 = vmatpush2.msra.mxu0 0.0
    %657 = vmatprep.subr.mxu0 0.0
    %658 = vmatpush2.msra.mxu0 0.0
    %659 = vmatprep.subr.mxu0 0.0
    %660 = vmatpush2.msra.mxu0 0.0
    %661 = vmatprep.subr.mxu0 0.0
    %662 = vmatpush2.msra.mxu0 0.0
    %663 = vmatprep.subr.mxu0 0.0
    %664 = vmatpush2.msra.mxu0 0.0
    %665 = vmatprep.subr.mxu0 0.0
    %666 = vmatpush2.msra.mxu0 0.0
    %667 = vmatprep.subr.mxu0 0.0
    %668 = vmatpush2.msra.mxu0 0.0
    %669 = vmatprep.mubr.f32.mxu0 0.0
    %670 = vmatmul.mubr.f32.gmra.mxu0 %v39
    %v671 = vpop.f32.mrf.mxu0
    %v672 = vadd.f32 0.0, %v671
    %v673 = vpop.f32.mrf.mxu0
    %674 = vmatprep.mubr.f32.mxu0 0.0
    %675 = vmatmul.mubr.f32.gmra.mxu0 %v42
    %v676 = vpop.f32.mrf.mxu0
    %v677 = vadd.f32 0.0, %v676
    %v678 = vpop.f32.mrf.mxu0
    %679 = vdwg.mxu0
    %680 = vset.pattern.permute.xlu0 3
    %681 = vperm.xlu0 %680, %v186
    %v682 = vpop.permute.xlu0 %681
    %684 = vset.pattern.permute.xlu0 3
    %685 = vperm.xlu0 %684, %v191
    %v686 = vpop.permute.xlu0 %685
    %v688 = vlaneseq
    %v689 = vshrl.u32 %v688, 7
    %v690 = vsub.s32 3, %v689
    %v691 = vrot.slane %v111, %v690
    %v692 = vadd.f32 %v682, %v691
    %v693 = vadd.f32 %v686, %v691
    %vm694 = vcmp.gt.f32.partialorder %v692, 0.0
    %vm695 = vcmp.gt.f32.partialorder %v693, 0.0
    %v696 = vmul.f32 %v692, 0.2
    %v697 = vmul.f32 %v693, 0.2
    %v698 = vsel %vm694, %v692, %v696
    %v699 = vsel %vm695, %v693, %v697
    %v700 = vsel %vm295, %v698, -1e+30
    %v701 = vsel %vm296, %v699, -1e+30
    %v702 = vsel %vm299, %v700, -inf
    %703 = vmax.xlane.f32.xlu0 %v702
    %v704 = vpop.xlane.xlu0 %703
    %v705 = vsel %vm299, %v701, -inf
    %706 = vmax.xlane.f32.xlu0 %v705
    %v707 = vpop.xlane.xlu0 %706
    %v708 = vsub.f32 %v700, %v704
    %v709 = vsub.f32 %v701, %v707
    %v710 = vmul.f32 %v708, 1.442695
    %v711 = vpow.pop %v710
    %v712 = vmul.f32 %v709, 1.442695
    %v713 = vpow.pop %v712
    %v714 = vsel %vm299, %v711, 0.0
    %715 = vadd.xlane.f32.xlu0 %v714
    %v716 = vpop.xlane.xlu0 %715
    %v717 = vsel %vm299, %v713, 0.0
    %718 = vadd.xlane.f32.xlu0 %v717
    %v719 = vpop.xlane.xlu0 %718
    %v720 = vrcp.pop %v716
    %v721 = vrcp.pop %v719
    %v722 = vmul.f32 %v711, %v720
    %v723 = vmul.f32 %v713, %v721
    %726 = vrot.lane.b32.xlu0 %v722, 48
    %v727 = vpop.permute.xlu0 %726
    %728 = vrot.lane.b32.xlu0 %v723, 48
    %v729 = vpop.permute.xlu0 %728
    %vm732 = vcmask 523648
    %733 = vst.msk [vmem:[#allocation2] sm:$0xff] %vm732, %v727
    %734 = vst.msk [vmem:[#allocation2 + $0x8] sm:$0xff] %vm732, %v729
    %735 = vst.msk [vmem:[#allocation3 + $0x30] sm:$0xff] %vm299, %v672
    %736 = vst.msk [vmem:[#allocation3 + $0x38] sm:$0xff] %vm299, %v677
    %v737 = vld [vmem:[#allocation2] sm:$0xff]
    %v738 = vld [vmem:[#allocation2 + $0x8] sm:$0xff]
    %v739 = vld [vmem:[#allocation3] sm:$0xff]
    %v740 = vld [vmem:[#allocation3 + $0x8] sm:$0xff]
    %v741 = vld [vmem:[#allocation3 + $0x10] sm:$0xff]
    %v742 = vld [vmem:[#allocation3 + $0x18] sm:$0xff]
    %v743 = vld [vmem:[#allocation3 + $0x20] sm:$0xff]
    %v744 = vld [vmem:[#allocation3 + $0x28] sm:$0xff]
    %v745 = vld [vmem:[#allocation3 + $0x30] sm:$0xff]
    %v746 = vld [vmem:[#allocation3 + $0x38] sm:$0xff]
    %vm747 = vcmask 523264
    %v749 = vsel %vm747, %v737, 0
    %v752 = vsel %vm747, %v738, 0
    %754 = vmatprep.subr.mxu0 0.0
    %755 = vmatpush1.msra.mxu0 0.0
    %756 = vmatprep.subr.mxu0 0.0
    %757 = vmatpush1.msra.mxu0 0.0
    %758 = vmatprep.subr.mxu0 0.0
    %759 = vmatpush1.msra.mxu0 0.0
    %760 = vmatprep.subr.mxu0 0.0
    %761 = vmatpush1.msra.mxu0 0.0
    %762 = vmatprep.subr.mxu0 0.0
    %763 = vmatpush1.msra.mxu0 0.0
    %764 = vmatprep.subr.mxu0 0.0
    %765 = vmatpush1.msra.mxu0 0.0
    %766 = vmatprep.subr.mxu0 0.0
    %767 = vmatpush1.msra.mxu0 0.0
    %768 = vmatprep.subr.mxu0 0.0
    %769 = vmatpush1.msra.mxu0 0.0
    %770 = vmatprep.subr.mxu0 0.0
    %771 = vmatpush1.msra.mxu0 %v746
    %772 = vmatprep.subr.mxu0 0.0
    %773 = vmatpush1.msra.mxu0 %v745
    %774 = vmatprep.subr.mxu0 0.0
    %775 = vmatpush1.msra.mxu0 %v744
    %776 = vmatprep.subr.mxu0 0.0
    %777 = vmatpush1.msra.mxu0 %v743
    %778 = vmatprep.subr.mxu0 0.0
    %779 = vmatpush1.msra.mxu0 %v742
    %780 = vmatprep.subr.mxu0 0.0
    %781 = vmatpush1.msra.mxu0 %v741
    %782 = vmatprep.subr.mxu0 0.0
    %783 = vmatpush1.msra.mxu0 %v740
    %784 = vmatprep.subr.mxu0 0.0
    %785 = vmatpush1.msra.mxu0 %v739
    %786 = vmatprep.subr.mxu0 0.0
    %787 = vmatpush2.msra.mxu0 0.0
    %788 = vmatprep.subr.mxu0 0.0
    %789 = vmatpush2.msra.mxu0 0.0
    %790 = vmatprep.subr.mxu0 0.0
    %791 = vmatpush2.msra.mxu0 0.0
    %792 = vmatprep.subr.mxu0 0.0
    %793 = vmatpush2.msra.mxu0 0.0
    %794 = vmatprep.subr.mxu0 0.0
    %795 = vmatpush2.msra.mxu0 0.0
    %796 = vmatprep.subr.mxu0 0.0
    %797 = vmatpush2.msra.mxu0 0.0
    %798 = vmatprep.subr.mxu0 0.0
    %799 = vmatpush2.msra.mxu0 0.0
    %800 = vmatprep.subr.mxu0 0.0
    %801 = vmatpush2.msra.mxu0 0.0
    %802 = vmatprep.subr.mxu0 0.0
    %803 = vmatpush2.msra.mxu0 0.0
    %804 = vmatprep.subr.mxu0 0.0
    %805 = vmatpush2.msra.mxu0 0.0
    %806 = vmatprep.subr.mxu0 0.0
    %807 = vmatpush2.msra.mxu0 0.0
    %808 = vmatprep.subr.mxu0 0.0
    %809 = vmatpush2.msra.mxu0 0.0
    %810 = vmatprep.subr.mxu0 0.0
    %811 = vmatpush2.msra.mxu0 0.0
    %812 = vmatprep.subr.mxu0 0.0
    %813 = vmatpush2.msra.mxu0 0.0
    %814 = vmatprep.subr.mxu0 0.0
    %815 = vmatpush2.msra.mxu0 0.0
    %816 = vmatprep.subr.mxu0 0.0
    %817 = vmatpush2.msra.mxu0 0.0
    %818 = vmatprep.mubr.f32.mxu0 0.0
    %819 = vmatmul.mubr.f32.gmra.mxu0 %v749
    %v820 = vpop.f32.mrf.mxu0
    %v821 = vadd.f32 0.0, %v820
    %v822 = vpop.f32.mrf.mxu0
    %823 = vmatprep.mubr.f32.mxu0 0.0
    %824 = vmatmul.mubr.f32.gmra.mxu0 %v752
    %v825 = vpop.f32.mrf.mxu0
    %v826 = vadd.f32 0.0, %v825
    %v827 = vpop.f32.mrf.mxu0
    %828 = vdwg.mxu0
    %v829 = vmul.f32 %v821, 0.25
    %v830 = vmul.f32 %v826, 0.25
    %v831 = vld [vmem:[%s4 + $0x20] sm:$0x1]
    %v832 = vlaneseq
    %v833 = vshrl.u32 %v832, 7
    %v834 = vsub.s32 0, %v833
    %v835 = vrot.slane %v831, %v834
    %v836 = vadd.f32 %v829, %v835
    %v837 = vadd.f32 %v830, %v835
    %v838 = vmul.f32 %v836, 0.5
    %v839 = vmul.f32 %v837, 0.5
    %v840 = vmul.f32 %v836, 0.70710677
    %v841 = vmul.f32 %v837, 0.70710677
    %vm842 = vcmp.ge.f32.partialorder %v840, 0.0
    %vm843 = vcmp.ge.f32.partialorder %v841, 0.0
    %v844 = vsel %vm842, 1.0, -1.0
    %v845 = vsel %vm843, 1.0, -1.0
    %v846 = vand.u32 2147483647, %v840
    %v847 = vand.u32 2147483647, %v841
    %v848 = vmul.f32 %v846, 0.3275911
    %v849 = vmul.f32 %v847, 0.3275911
    %v850 = vadd.f32 %v848, 1.0
    %v851 = vadd.f32 %v849, 1.0
    %v852 = vrcp.pop %v850
    %v853 = vmul.f32 1.0, %v852
    %v854 = vrcp.pop %v851
    %v855 = vmul.f32 1.0, %v854
    %v856 = vmul.f32 %v853, 1.0614054
    %v857 = vmul.f32 %v855, 1.0614054
    %v858 = vadd.f32 %v856, -1.4531521
    %v859 = vadd.f32 %v857, -1.4531521
    %v860 = vmul.f32 %v858, %v853
    %v861 = vmul.f32 %v859, %v855
    %v862 = vadd.f32 %v860, 1.4214138
    %v863 = vadd.f32 %v861, 1.4214138
    %v864 = vmul.f32 %v862, %v853
    %v865 = vmul.f32 %v863, %v855
    %v866 = vadd.f32 %v864, -0.28449672
    %v867 = vadd.f32 %v865, -0.28449672
    %v868 = vmul.f32 %v866, %v853
    %v869 = vmul.f32 %v867, %v855
    %v870 = vadd.f32 %v868, 0.2548296
    %v871 = vadd.f32 %v869, 0.2548296
    %v872 = vmul.f32 %v870, %v853
    %v873 = vmul.f32 %v871, %v855
    %v874 = vsub.f32 0.0, %v846
    %v875 = vsub.f32 0.0, %v847
    %v876 = vmul.f32 %v874, %v846
    %v877 = vmul.f32 %v875, %v847
    %v878 = vmul.f32 %v876, 1.442695
    %v879 = vpow.pop %v878
    %v880 = vmul.f32 %v877, 1.442695
    %v881 = vpow.pop %v880
    %v882 = vmul.f32 %v872, %v879
    %v883 = vmul.f32 %v873, %v881
    %v884 = vsub.f32 1.0, %v882
    %v885 = vsub.f32 1.0, %v883
    %v886 = vmul.f32 %v844, %v884
    %v887 = vmul.f32 %v845, %v885
    %v888 = vadd.f32 %v886, 1.0
    %v889 = vadd.f32 %v887, 1.0
    %v890 = vmul.f32 %v838, %v888
    %v891 = vmul.f32 %v839, %v889
    %v892 = vld [vmem:[%s4 + $0x21] sm:$0x1]
    %v893 = vlaneseq
    %v894 = vshrl.u32 %v893, 7
    %v895 = vsub.s32 0, %v894
    %v896 = vrot.slane %v892, %v895
    %v897 = vmul.f32 %v890, %v896
    %v898 = vmul.f32 %v891, %v896
    %v899 = vld [vmem:[%s4 + $0x22] sm:$0x1]
    %v900 = vlaneseq
    %v901 = vshrl.u32 %v900, 7
    %v902 = vsub.s32 0, %v901
    %v903 = vrot.slane %v899, %v902
    %v904 = vadd.f32 %v897, %v903
    %v905 = vadd.f32 %v898, %v903
    %v906 = vld [vmem:[%s5] sm:$0xff]
    %v907 = vld [vmem:[%s5 + $0x8] sm:$0xf]
    %v909 = vsel %vm299, %v906, 0
    %v912 = vsel %vm299, %v907, 0
    %914 = vmatprep.subr.mxu0 0.0
    %915 = vmatpush1.msra.mxu0 0.0
    %916 = vmatprep.subr.mxu0 0.0
    %917 = vmatpush1.msra.mxu0 0.0
    %918 = vmatprep.subr.mxu0 0.0
    %919 = vmatpush1.msra.mxu0 0.0
    %920 = vmatprep.subr.mxu0 0.0
    %921 = vmatpush1.msra.mxu0 0.0
    %922 = vmatprep.subr.mxu0 0.0
    %923 = vmatpush1.msra.mxu0 0.0
    %924 = vmatprep.subr.mxu0 0.0
    %925 = vmatpush1.msra.mxu0 0.0
    %926 = vmatprep.subr.mxu0 0.0
    %927 = vmatpush1.msra.mxu0 0.0
    %928 = vmatprep.subr.mxu0 0.0
    %929 = vmatpush1.msra.mxu0 0.0
    %930 = vmatprep.subr.mxu0 0.0
    %931 = vmatpush1.msra.mxu0 0.0
    %932 = vmatprep.subr.mxu0 0.0
    %933 = vmatpush1.msra.mxu0 0.0
    %934 = vmatprep.subr.mxu0 0.0
    %935 = vmatpush1.msra.mxu0 0.0
    %936 = vmatprep.subr.mxu0 0.0
    %937 = vmatpush1.msra.mxu0 0.0
    %938 = vmatprep.subr.mxu0 0.0
    %939 = vmatpush1.msra.mxu0 0.0
    %940 = vmatprep.subr.mxu0 0.0
    %941 = vmatpush1.msra.mxu0 0.0
    %942 = vmatprep.subr.mxu0 0.0
    %943 = vmatpush1.msra.mxu0 %v905
    %944 = vmatprep.subr.mxu0 0.0
    %945 = vmatpush1.msra.mxu0 %v904
    %946 = vmatprep.subr.mxu0 0.0
    %947 = vmatpush2.msra.mxu0 0.0
    %948 = vmatprep.subr.mxu0 0.0
    %949 = vmatpush2.msra.mxu0 0.0
    %950 = vmatprep.subr.mxu0 0.0
    %951 = vmatpush2.msra.mxu0 0.0
    %952 = vmatprep.subr.mxu0 0.0
    %953 = vmatpush2.msra.mxu0 0.0
    %954 = vmatprep.subr.mxu0 0.0
    %955 = vmatpush2.msra.mxu0 0.0
    %956 = vmatprep.subr.mxu0 0.0
    %957 = vmatpush2.msra.mxu0 0.0
    %958 = vmatprep.subr.mxu0 0.0
    %959 = vmatpush2.msra.mxu0 0.0
    %960 = vmatprep.subr.mxu0 0.0
    %961 = vmatpush2.msra.mxu0 0.0
    %962 = vmatprep.subr.mxu0 0.0
    %963 = vmatpush2.msra.mxu0 0.0
    %964 = vmatprep.subr.mxu0 0.0
    %965 = vmatpush2.msra.mxu0 0.0
    %966 = vmatprep.subr.mxu0 0.0
    %967 = vmatpush2.msra.mxu0 0.0
    %968 = vmatprep.subr.mxu0 0.0
    %969 = vmatpush2.msra.mxu0 0.0
    %970 = vmatprep.subr.mxu0 0.0
    %971 = vmatpush2.msra.mxu0 0.0
    %972 = vmatprep.subr.mxu0 0.0
    %973 = vmatpush2.msra.mxu0 0.0
    %974 = vmatprep.subr.mxu0 0.0
    %975 = vmatpush2.msra.mxu0 0.0
    %976 = vmatprep.subr.mxu0 0.0
    %977 = vmatpush2.msra.mxu0 0.0
    %978 = vmatprep.mubr.f32.mxu0 0.0
    %979 = vmatmul.mubr.f32.gmra.mxu0 %v909
    %v980 = vpop.f32.mrf.mxu0
    %v981 = vadd.f32 0.0, %v980
    %v982 = vpop.f32.mrf.mxu0
    %983 = vmatprep.mubr.f32.mxu0 0.0
    %984 = vmatmul.mubr.f32.gmra.mxu0 %v912
    %v985 = vpop.f32.mrf.mxu0
    %v986 = vadd.f32 0.0, %v985
    %v987 = vpop.f32.mrf.mxu0
    %988 = vdwg.mxu0
    %s989 = scalar_lea.vmem %s5, 16
    %v990 = vld [vmem:[%s989] sm:$0xff]
    %v991 = vld [vmem:[%s989 + $0x8] sm:$0xf]
    %v993 = vsel %vm299, %v990, 0
    %v996 = vsel %vm299, %v991, 0
    %998 = vmatprep.subr.mxu0 0.0
    %999 = vmatpush1.msra.mxu0 0.0
    %1000 = vmatprep.subr.mxu0 0.0
    %1001 = vmatpush1.msra.mxu0 0.0
    %1002 = vmatprep.subr.mxu0 0.0
    %1003 = vmatpush1.msra.mxu0 0.0
    %1004 = vmatprep.subr.mxu0 0.0
    %1005 = vmatpush1.msra.mxu0 0.0
    %1006 = vmatprep.subr.mxu0 0.0
    %1007 = vmatpush1.msra.mxu0 0.0
    %1008 = vmatprep.subr.mxu0 0.0
    %1009 = vmatpush1.msra.mxu0 0.0
    %1010 = vmatprep.subr.mxu0 0.0
    %1011 = vmatpush1.msra.mxu0 0.0
    %1012 = vmatprep.subr.mxu0 0.0
    %1013 = vmatpush1.msra.mxu0 0.0
    %1014 = vmatprep.subr.mxu0 0.0
    %1015 = vmatpush1.msra.mxu0 0.0
    %1016 = vmatprep.subr.mxu0 0.0
    %1017 = vmatpush1.msra.mxu0 0.0
    %1018 = vmatprep.subr.mxu0 0.0
    %1019 = vmatpush1.msra.mxu0 0.0
    %1020 = vmatprep.subr.mxu0 0.0
    %1021 = vmatpush1.msra.mxu0 0.0
    %1022 = vmatprep.subr.mxu0 0.0
    %1023 = vmatpush1.msra.mxu0 0.0
    %1024 = vmatprep.subr.mxu0 0.0
    %1025 = vmatpush1.msra.mxu0 0.0
    %1026 = vmatprep.subr.mxu0 0.0
    %1027 = vmatpush1.msra.mxu0 %v905
    %1028 = vmatprep.subr.mxu0 0.0
    %1029 = vmatpush1.msra.mxu0 %v904
    %1030 = vmatprep.subr.mxu0 0.0
    %1031 = vmatpush2.msra.mxu0 0.0
    %1032 = vmatprep.subr.mxu0 0.0
    %1033 = vmatpush2.msra.mxu0 0.0
    %1034 = vmatprep.subr.mxu0 0.0
    %1035 = vmatpush2.msra.mxu0 0.0
    %1036 = vmatprep.subr.mxu0 0.0
    %1037 = vmatpush2.msra.mxu0 0.0
    %1038 = vmatprep.subr.mxu0 0.0
    %1039 = vmatpush2.msra.mxu0 0.0
    %1040 = vmatprep.subr.mxu0 0.0
    %1041 = vmatpush2.msra.mxu0 0.0
    %1042 = vmatprep.subr.mxu0 0.0
    %1043 = vmatpush2.msra.mxu0 0.0
    %1044 = vmatprep.subr.mxu0 0.0
    %1045 = vmatpush2.msra.mxu0 0.0
    %1046 = vmatprep.subr.mxu0 0.0
    %1047 = vmatpush2.msra.mxu0 0.0
    %1048 = vmatprep.subr.mxu0 0.0
    %1049 = vmatpush2.msra.mxu0 0.0
    %1050 = vmatprep.subr.mxu0 0.0
    %1051 = vmatpush2.msra.mxu0 0.0
    %1052 = vmatprep.subr.mxu0 0.0
    %1053 = vmatpush2.msra.mxu0 0.0
    %1054 = vmatprep.subr.mxu0 0.0
    %1055 = vmatpush2.msra.mxu0 0.0
    %1056 = vmatprep.subr.mxu0 0.0
    %1057 = vmatpush2.msra.mxu0 0.0
    %1058 = vmatprep.subr.mxu0 0.0
    %1059 = vmatpush2.msra.mxu0 0.0
    %1060 = vmatprep.subr.mxu0 0.0
    %1061 = vmatpush2.msra.mxu0 0.0
    %1062 = vmatprep.mubr.f32.mxu0 0.0
    %1063 = vmatmul.mubr.f32.gmra.mxu0 %v993
    %v1064 = vpop.f32.mrf.mxu0
    %v1065 = vadd.f32 0.0, %v1064
    %v1066 = vpop.f32.mrf.mxu0
    %1067 = vmatprep.mubr.f32.mxu0 0.0
    %1068 = vmatmul.mubr.f32.gmra.mxu0 %v996
    %v1069 = vpop.f32.mrf.mxu0
    %v1070 = vadd.f32 0.0, %v1069
    %v1071 = vpop.f32.mrf.mxu0
    %1072 = vdwg.mxu0
    %v1073 = vld [vmem:[%s4] sm:$0xff]
    %v1074 = vld [vmem:[%s4 + $0x8] sm:$0xff]
    %v1075 = vld [vmem:[%s4 + $0x10] sm:$0xff]
    %v1076 = vld [vmem:[%s4 + $0x18] sm:$0xff]
    %v1078 = vsel %vm299, %v1065, 0
    %v1081 = vsel %vm299, %v1070, 0
    %1083 = vmatprep.subr.mxu0 0.0
    %1084 = vmatpush1.msra.mxu0 0.0
    %1085 = vmatprep.subr.mxu0 0.0
    %1086 = vmatpush1.msra.mxu0 0.0
    %1087 = vmatprep.subr.mxu0 0.0
    %1088 = vmatpush1.msra.mxu0 0.0
    %1089 = vmatprep.subr.mxu0 0.0
    %1090 = vmatpush1.msra.mxu0 0.0
    %1091 = vmatprep.subr.mxu0 0.0
    %1092 = vmatpush1.msra.mxu0 0.0
    %1093 = vmatprep.subr.mxu0 0.0
    %1094 = vmatpush1.msra.mxu0 0.0
    %1095 = vmatprep.subr.mxu0 0.0
    %1096 = vmatpush1.msra.mxu0 0.0
    %1097 = vmatprep.subr.mxu0 0.0
    %1098 = vmatpush1.msra.mxu0 0.0
    %1099 = vmatprep.subr.mxu0 0.0
    %1100 = vmatpush1.msra.mxu0 0.0
    %1101 = vmatprep.subr.mxu0 0.0
    %1102 = vmatpush1.msra.mxu0 0.0
    %1103 = vmatprep.subr.mxu0 0.0
    %1104 = vmatpush1.msra.mxu0 0.0
    %1105 = vmatprep.subr.mxu0 0.0
    %1106 = vmatpush1.msra.mxu0 0.0
    %1107 = vmatprep.subr.mxu0 0.0
    %1108 = vmatpush1.msra.mxu0 0.0
    %1109 = vmatprep.subr.mxu0 0.0
    %1110 = vmatpush1.msra.mxu0 0.0
    %1111 = vmatprep.subr.mxu0 0.0
    %1112 = vmatpush1.msra.mxu0 %v1076
    %1113 = vmatprep.subr.mxu0 0.0
    %1114 = vmatpush1.msra.mxu0 %v1075
    %1115 = vmatprep.subr.mxu0 0.0
    %1116 = vmatpush2.msra.mxu0 0.0
    %1117 = vmatprep.subr.mxu0 0.0
    %1118 = vmatpush2.msra.mxu0 0.0
    %1119 = vmatprep.subr.mxu0 0.0
    %1120 = vmatpush2.msra.mxu0 0.0
    %1121 = vmatprep.subr.mxu0 0.0
    %1122 = vmatpush2.msra.mxu0 0.0
    %1123 = vmatprep.subr.mxu0 0.0
    %1124 = vmatpush2.msra.mxu0 0.0
    %1125 = vmatprep.subr.mxu0 0.0
    %1126 = vmatpush2.msra.mxu0 0.0
    %1127 = vmatprep.subr.mxu0 0.0
    %1128 = vmatpush2.msra.mxu0 0.0
    %1129 = vmatprep.subr.mxu0 0.0
    %1130 = vmatpush2.msra.mxu0 0.0
    %1131 = vmatprep.subr.mxu0 0.0
    %1132 = vmatpush2.msra.mxu0 0.0
    %1133 = vmatprep.subr.mxu0 0.0
    %1134 = vmatpush2.msra.mxu0 0.0
    %1135 = vmatprep.subr.mxu0 0.0
    %1136 = vmatpush2.msra.mxu0 0.0
    %1137 = vmatprep.subr.mxu0 0.0
    %1138 = vmatpush2.msra.mxu0 0.0
    %1139 = vmatprep.subr.mxu0 0.0
    %1140 = vmatpush2.msra.mxu0 0.0
    %1141 = vmatprep.subr.mxu0 0.0
    %1142 = vmatpush2.msra.mxu0 0.0
    %1143 = vmatprep.subr.mxu0 0.0
    %1144 = vmatpush2.msra.mxu0 0.0
    %1145 = vmatprep.subr.mxu0 0.0
    %1146 = vmatpush2.msra.mxu0 0.0
    %1147 = vmatprep.mubr.f32.mxu0 0.0
    %1148 = vmatmul.mubr.f32.gmra.mxu0 %v1078
    %v1149 = vpop.f32.mrf.mxu0
    %v1150 = vadd.f32 0.0, %v1149
    %v1151 = vpop.f32.mrf.mxu0
    %1152 = vmatprep.mubr.f32.mxu0 0.0
    %1153 = vmatmul.mubr.f32.gmra.mxu0 %v1081
    %v1154 = vpop.f32.mrf.mxu0
    %v1155 = vadd.f32 0.0, %v1154
    %v1156 = vpop.f32.mrf.mxu0
    %1157 = vdwg.mxu0
    %v1159 = vsel %vm299, %v981, 0
    %v1162 = vsel %vm299, %v986, 0
    %1164 = vmatprep.subr.mxu0 0.0
    %1165 = vmatpush1.msra.mxu0 0.0
    %1166 = vmatprep.subr.mxu0 0.0
    %1167 = vmatpush1.msra.mxu0 0.0
    %1168 = vmatprep.subr.mxu0 0.0
    %1169 = vmatpush1.msra.mxu0 0.0
    %1170 = vmatprep.subr.mxu0 0.0
    %1171 = vmatpush1.msra.mxu0 0.0
    %1172 = vmatprep.subr.mxu0 0.0
    %1173 = vmatpush1.msra.mxu0 0.0
    %1174 = vmatprep.subr.mxu0 0.0
    %1175 = vmatpush1.msra.mxu0 0.0
    %1176 = vmatprep.subr.mxu0 0.0
    %1177 = vmatpush1.msra.mxu0 0.0
    %1178 = vmatprep.subr.mxu0 0.0
    %1179 = vmatpush1.msra.mxu0 0.0
    %1180 = vmatprep.subr.mxu0 0.0
    %1181 = vmatpush1.msra.mxu0 0.0
    %1182 = vmatprep.subr.mxu0 0.0
    %1183 = vmatpush1.msra.mxu0 0.0
    %1184 = vmatprep.subr.mxu0 0.0
    %1185 = vmatpush1.msra.mxu0 0.0
    %1186 = vmatprep.subr.mxu0 0.0
    %1187 = vmatpush1.msra.mxu0 0.0
    %1188 = vmatprep.subr.mxu0 0.0
    %1189 = vmatpush1.msra.mxu0 0.0
    %1190 = vmatprep.subr.mxu0 0.0
    %1191 = vmatpush1.msra.mxu0 0.0
    %1192 = vmatprep.subr.mxu0 0.0
    %1193 = vmatpush1.msra.mxu0 %v1074
    %1194 = vmatprep.subr.mxu0 0.0
    %1195 = vmatpush1.msra.mxu0 %v1073
    %1196 = vmatprep.subr.mxu0 0.0
    %1197 = vmatpush2.msra.mxu0 0.0
    %1198 = vmatprep.subr.mxu0 0.0
    %1199 = vmatpush2.msra.mxu0 0.0
    %1200 = vmatprep.subr.mxu0 0.0
    %1201 = vmatpush2.msra.mxu0 0.0
    %1202 = vmatprep.subr.mxu0 0.0
    %1203 = vmatpush2.msra.mxu0 0.0
    %1204 = vmatprep.subr.mxu0 0.0
    %1205 = vmatpush2.msra.mxu0 0.0
    %1206 = vmatprep.subr.mxu0 0.0
    %1207 = vmatpush2.msra.mxu0 0.0
    %1208 = vmatprep.subr.mxu0 0.0
    %1209 = vmatpush2.msra.mxu0 0.0
    %1210 = vmatprep.subr.mxu0 0.0
    %1211 = vmatpush2.msra.mxu0 0.0
    %1212 = vmatprep.subr.mxu0 0.0
    %1213 = vmatpush2.msra.mxu0 0.0
    %1214 = vmatprep.subr.mxu0 0.0
    %1215 = vmatpush2.msra.mxu0 0.0
    %1216 = vmatprep.subr.mxu0 0.0
    %1217 = vmatpush2.msra.mxu0 0.0
    %1218 = vmatprep.subr.mxu0 0.0
    %1219 = vmatpush2.msra.mxu0 0.0
    %1220 = vmatprep.subr.mxu0 0.0
    %1221 = vmatpush2.msra.mxu0 0.0
    %1222 = vmatprep.subr.mxu0 0.0
    %1223 = vmatpush2.msra.mxu0 0.0
    %1224 = vmatprep.subr.mxu0 0.0
    %1225 = vmatpush2.msra.mxu0 0.0
    %1226 = vmatprep.subr.mxu0 0.0
    %1227 = vmatpush2.msra.mxu0 0.0
    %1228 = vmatprep.mubr.f32.mxu0 0.0
    %1229 = vmatmul.mubr.f32.gmra.mxu0 %v1159
    %v1230 = vpop.f32.mrf.mxu0
    %v1231 = vadd.f32 %v1150, %v1230
    %v1232 = vpop.f32.mrf.mxu0
    %1233 = vmatprep.mubr.f32.mxu0 0.0
    %1234 = vmatmul.mubr.f32.gmra.mxu0 %v1162
    %v1235 = vpop.f32.mrf.mxu0
    %v1236 = vadd.f32 %v1155, %v1235
    %v1237 = vpop.f32.mrf.mxu0
    %1238 = vdwg.mxu0
    %v1239 = vld [vmem:[%s4 + $0x23] sm:$0x1]
    %v1240 = vlaneseq
    %v1241 = vshrl.u32 %v1240, 7
    %v1242 = vsub.s32 0, %v1241
    %v1243 = vrot.slane %v1239, %v1242
    %v1244 = vadd.f32 %v1231, %v1243
    %v1245 = vadd.f32 %v1236, %v1243
    %v1246 = vmul.f32 %v1244, 0.5
    %v1247 = vmul.f32 %v1245, 0.5
    %v1248 = vmul.f32 %v1244, 0.70710677
    %v1249 = vmul.f32 %v1245, 0.70710677
    %vm1250 = vcmp.ge.f32.partialorder %v1248, 0.0
    %vm1251 = vcmp.ge.f32.partialorder %v1249, 0.0
    %v1252 = vsel %vm1250, 1.0, -1.0
    %v1253 = vsel %vm1251, 1.0, -1.0
    %v1254 = vand.u32 2147483647, %v1248
    %v1255 = vand.u32 2147483647, %v1249
    %v1256 = vmul.f32 %v1254, 0.3275911
    %v1257 = vmul.f32 %v1255, 0.3275911
    %v1258 = vadd.f32 %v1256, 1.0
    %v1259 = vadd.f32 %v1257, 1.0
    %v1260 = vrcp.pop %v1258
    %v1261 = vmul.f32 1.0, %v1260
    %v1262 = vrcp.pop %v1259
    %v1263 = vmul.f32 1.0, %v1262
    %v1264 = vmul.f32 %v1261, 1.0614054
    %v1265 = vmul.f32 %v1263, 1.0614054
    %v1266 = vadd.f32 %v1264, -1.4531521
    %v1267 = vadd.f32 %v1265, -1.4531521
    %v1268 = vmul.f32 %v1266, %v1261
    %v1269 = vmul.f32 %v1267, %v1263
    %v1270 = vadd.f32 %v1268, 1.4214138
    %v1271 = vadd.f32 %v1269, 1.4214138
    %v1272 = vmul.f32 %v1270, %v1261
    %v1273 = vmul.f32 %v1271, %v1263
    %v1274 = vadd.f32 %v1272, -0.28449672
    %v1275 = vadd.f32 %v1273, -0.28449672
    %v1276 = vmul.f32 %v1274, %v1261
    %v1277 = vmul.f32 %v1275, %v1263
    %v1278 = vadd.f32 %v1276, 0.2548296
    %v1279 = vadd.f32 %v1277, 0.2548296
    %v1280 = vmul.f32 %v1278, %v1261
    %v1281 = vmul.f32 %v1279, %v1263
    %v1282 = vsub.f32 0.0, %v1254
    %v1283 = vsub.f32 0.0, %v1255
    %v1284 = vmul.f32 %v1282, %v1254
    %v1285 = vmul.f32 %v1283, %v1255
    %v1286 = vmul.f32 %v1284, 1.442695
    %v1287 = vpow.pop %v1286
    %v1288 = vmul.f32 %v1285, 1.442695
    %v1289 = vpow.pop %v1288
    %v1290 = vmul.f32 %v1280, %v1287
    %v1291 = vmul.f32 %v1281, %v1289
    %v1292 = vsub.f32 1.0, %v1290
    %v1293 = vsub.f32 1.0, %v1291
    %v1294 = vmul.f32 %v1252, %v1292
    %v1295 = vmul.f32 %v1253, %v1293
    %v1296 = vadd.f32 %v1294, 1.0
    %v1297 = vadd.f32 %v1295, 1.0
    %v1298 = vmul.f32 %v1246, %v1296
    %v1299 = vmul.f32 %v1247, %v1297
    %v1300 = vld [vmem:[%s4 + $0x24] sm:$0x3]
    %v1301 = vld [vmem:[%s4 + $0x26] sm:$0x1]
    %v1302 = vlaneseq
    %v1303 = vshrl.u32 %v1302, 7
    %v1304 = vsub.s32 0, %v1303
    %v1305 = vrot.slane %v1301, %v1304
    %v1307 = vsel %vm299, %v1298, 0
    %v1310 = vsel %vm299, %v1299, 0
    %v1313 = vsel %vm299, %v1300, 0
    %1315 = vmatprep.subr.mxu0 0.0
    %1316 = vmatpush1.xpose.msra.mxu0 0.0
    %1317 = vmatprep.subr.mxu0 0.0
    %1318 = vmatpush1.xpose.msra.mxu0 0.0
    %1319 = vmatprep.subr.mxu0 0.0
    %1320 = vmatpush1.xpose.msra.mxu0 0.0
    %1321 = vmatprep.subr.mxu0 0.0
    %1322 = vmatpush1.xpose.msra.mxu0 0.0
    %1323 = vmatprep.subr.mxu0 0.0
    %1324 = vmatpush1.xpose.msra.mxu0 0.0
    %1325 = vmatprep.subr.mxu0 0.0
    %1326 = vmatpush1.xpose.msra.mxu0 0.0
    %1327 = vmatprep.subr.mxu0 0.0
    %1328 = vmatpush1.xpose.msra.mxu0 0.0
    %1329 = vmatprep.subr.mxu0 0.0
    %1330 = vmatpush1.xpose.msra.mxu0 0.0
    %1331 = vmatprep.subr.mxu0 0.0
    %1332 = vmatpush1.xpose.msra.mxu0 0.0
    %1333 = vmatprep.subr.mxu0 0.0
    %1334 = vmatpush1.xpose.msra.mxu0 0.0
    %1335 = vmatprep.subr.mxu0 0.0
    %1336 = vmatpush1.xpose.msra.mxu0 0.0
    %1337 = vmatprep.subr.mxu0 0.0
    %1338 = vmatpush1.xpose.msra.mxu0 0.0
    %1339 = vmatprep.subr.mxu0 0.0
    %1340 = vmatpush1.xpose.msra.mxu0 0.0
    %1341 = vmatprep.subr.mxu0 0.0
    %1342 = vmatpush1.xpose.msra.mxu0 0.0
    %1343 = vmatprep.subr.mxu0 0.0
    %1344 = vmatpush1.xpose.msra.mxu0 0.0
    %1345 = vmatprep.subr.mxu0 0.0
    %1346 = vmatpush1.xpose.msra.mxu0 %v1313
    %1347 = vmatprep.subr.mxu0 0.0
    %1348 = vmatpush2.xpose.msra.mxu0 0.0
    %1349 = vmatprep.subr.mxu0 0.0
    %1350 = vmatpush2.xpose.msra.mxu0 0.0
    %1351 = vmatprep.subr.mxu0 0.0
    %1352 = vmatpush2.xpose.msra.mxu0 0.0
    %1353 = vmatprep.subr.mxu0 0.0
    %1354 = vmatpush2.xpose.msra.mxu0 0.0
    %1355 = vmatprep.subr.mxu0 0.0
    %1356 = vmatpush2.xpose.msra.mxu0 0.0
    %1357 = vmatprep.subr.mxu0 0.0
    %1358 = vmatpush2.xpose.msra.mxu0 0.0
    %1359 = vmatprep.subr.mxu0 0.0
    %1360 = vmatpush2.xpose.msra.mxu0 0.0
    %1361 = vmatprep.subr.mxu0 0.0
    %1362 = vmatpush2.xpose.msra.mxu0 0.0
    %1363 = vmatprep.subr.mxu0 0.0
    %1364 = vmatpush2.xpose.msra.mxu0 0.0
    %1365 = vmatprep.subr.mxu0 0.0
    %1366 = vmatpush2.xpose.msra.mxu0 0.0
    %1367 = vmatprep.subr.mxu0 0.0
    %1368 = vmatpush2.xpose.msra.mxu0 0.0
    %1369 = vmatprep.subr.mxu0 0.0
    %1370 = vmatpush2.xpose.msra.mxu0 0.0
    %1371 = vmatprep.subr.mxu0 0.0
    %1372 = vmatpush2.xpose.msra.mxu0 0.0
    %1373 = vmatprep.subr.mxu0 0.0
    %1374 = vmatpush2.xpose.msra.mxu0 0.0
    %1375 = vmatprep.subr.mxu0 0.0
    %1376 = vmatpush2.xpose.msra.mxu0 0.0
    %1377 = vmatprep.subr.mxu0 0.0
    %1378 = vmatpush2.xpose.msra.mxu0 0.0
    %1379 = vmatprep.mubr.f32.mxu0 0.0
    %1380 = vmatmul.mubr.f32.gmra.mxu0 %v1307
    %v1381 = vpop.f32.mrf.mxu0
    %v1382 = vadd.f32 %v1305, %v1381
    %v1383 = vpop.f32.mrf.mxu0
    %1384 = vmatprep.mubr.f32.mxu0 0.0
    %1385 = vmatmul.mubr.f32.gmra.mxu0 %v1310
    %v1386 = vpop.f32.mrf.mxu0
    %v1387 = vadd.f32 %v1305, %v1386
    %v1388 = vpop.f32.mrf.mxu0
    %1389 = vdwg.mxu0
    %vm1390 = vcmask 15360
    %v1391 = vsel %vm1390, %v1382, -inf
    %1392 = vmax.xlane.f32.xlu0 %v1391
    %v1393 = vpop.xlane.xlu0 %1392
    %vm1394 = vcmask 11264
    %v1395 = vsel %vm1394, %v1387, -inf
    %1396 = vmax.xlane.f32.xlu0 %v1395
    %v1397 = vpop.xlane.xlu0 %1396
    %v1398 = vsub.f32 %v1382, %v1393
    %v1399 = vsub.f32 %v1387, %v1397
    %v1400 = vmul.f32 %v1398, 1.442695
    %v1401 = vpow.pop %v1400
    %v1402 = vmul.f32 %v1399, 1.442695
    %v1403 = vpow.pop %v1402
    %v1404 = vsel %vm1390, %v1401, 0.0
    %1405 = vadd.xlane.f32.xlu0 %v1404
    %v1406 = vpop.xlane.xlu0 %1405
    %v1407 = vsel %vm1394, %v1403, 0.0
    %1408 = vadd.xlane.f32.xlu0 %v1407
    %v1409 = vpop.xlane.xlu0 %1408
    %v1410 = vrcp.pop %v1406
    %v1411 = vrcp.pop %v1409
    %v1412 = vmul.f32 %v1401, %v1410
    %v1413 = vmul.f32 %v1403, %v1411
    %1414 = vst.msk [vmem:[%s7] sm:$0xff] %vm1390, %v1412
    %1415 = vst.msk [vmem:[%s7 + $0x8] sm:$0xf] %vm1394, %v1413
    %v1416 = vlog2.pop %v1406
    %v1417 = vmul.f32 %v1416, 0.6931472
    %v1418 = vlog2.pop %v1409
    %v1419 = vmul.f32 %v1418, 0.6931472
    %v1420 = vsub.f32 %v1398, %v1417
    %v1421 = vsub.f32 %v1399, %v1419
    %v1422 = vld [vmem:[%s6] sm:$0xff]
    %v1423 = vld [vmem:[%s6 + $0x8] sm:$0xf]
    %v1424 = vsub.f32 0.0, %v1420
    %v1425 = vsub.f32 0.0, %v1421
    %v1426 = vmul.f32 %v1422, %v1424
    %v1427 = vmul.f32 %v1423, %v1425
    %v1428 = vsel %vm1390, %v1426, 0.0
    %v1429 = vsel %vm1394, %v1427, 0.0
    %v1430 = vadd.f32 %v1428, %v1429
    %1431 = vadd.xlane.f32.xlu0 %v1430
    %v1432 = vpop.xlane.xlu0 %1431
    %v1433 = vrot.slane %v1432, 4
    %v1434 = vadd.f32 %v1432, %v1433
    %v1435 = vrot.slane %v1434, 2
    %v1436 = vadd.f32 %v1434, %v1435
    %v1437 = vrot.slane %v1436, 1
    %v1438 = vadd.f32 %v1436, %v1437
    %s1439 = vtos %v1438
    %v1440 = vstv %s1439
    %v1441 = vsel %vm1390, %v1422, 0.0
    %v1442 = vsel %vm1394, %v1423, 0.0
    %v1443 = vadd.f32 %v1441, %v1442
    %1444 = vadd.xlane.f32.xlu0 %v1443
    %v1445 = vpop.xlane.xlu0 %1444
    %v1446 = vrot.slane %v1445, 4
    %v1447 = vadd.f32 %v1445, %v1446
    %v1448 = vrot.slane %v1447, 2
    %v1449 = vadd.f32 %v1447, %v1448
    %v1450 = vrot.slane %v1449, 1
    %v1451 = vadd.f32 %v1449, %v1450
    %s1452 = vtos %v1451
    %v1453 = vstv %s1452
    %v1454 = vrcp.pop %v1453
    %v1455 = vmul.f32 %v1440, %v1454
    %vm1456 = vcmask 0
    %1457 = vst.msk [vmem:[#allocation4] sm:$0x1] %vm1456, %v1455
    // Predicated region
    $region30: #{gat_uni_layer_bi_proj_forward.1} parent=1 // pred_check
      _
    $region31: #{gat_uni_layer_bi_proj_forward.1} parent=1 // pred_check_branch
      %1459 = sbr.rel (0) target = $region33
    $region32: #{gat_uni_layer_bi_proj_forward.1} parent=1 // pred_region
      _
    $region33: #{gat_uni_layer_bi_proj_forward.1} parent=1 // pred_fallthru
      _
    // Predicated region
    $region34: #{gat_uni_layer_bi_proj_forward.1} parent=1 // pred_check
      _
    $region35: #{gat_uni_layer_bi_proj_forward.1} parent=1 // pred_check_branch
      %1461 = sbr.rel (0) target = $region37
    $region36: #{gat_uni_layer_bi_proj_forward.1} parent=1 // pred_region
      %s1463 = ssub.s32 16, 16
      %1464 = vsyncadd [#allocation5], %s1463
      %s1466 = sshll.u32 [#allocation4], 4
      %s1467 = int_to_ptr.vmem [resolvable:$true] %s1466
      %1469 = dma.vmem_to_hbm [thread:$0]  %s1467, 16, %s8, [#allocation5]
    $region37: #{gat_uni_layer_bi_proj_forward.1} parent=1 // pred_fallthru
      _
    // Predicated region
    $region38: #{gat_uni_layer_bi_proj_forward.1} parent=1 // pred_check
      _
    $region39: #{gat_uni_layer_bi_proj_forward.1} parent=1 // pred_check_branch
      %1471 = sbr.rel (0) target = $region41
    $region40: #{gat_uni_layer_bi_proj_forward.1} parent=1 // pred_region
      _
    $region41: #{gat_uni_layer_bi_proj_forward.1} parent=1 // pred_fallthru
      _
    // Predicated region
    $region42: #{gat_uni_layer_bi_proj_forward.1} parent=1 // pred_check
      _
    $region43: #{gat_uni_layer_bi_proj_forward.1} parent=1 // pred_check_branch
      %1473 = sbr.rel (0) target = $region45
    $region44: #{gat_uni_layer_bi_proj_forward.1} parent=1 // pred_region
      %1474 = dma.done [#allocation5], 16
    $region45: #{gat_uni_layer_bi_proj_forward.1} parent=1 // pred_fallthru
      _
    %1475 = vsyncpa [#allocation5], 1

</llo_original>
